<compile_context>
chip_gen: v7x
topology: tpu7x:2x2x1
jax: 0.10.0
libtpu: 0.0.40
codegen_flags: <defaults>
</compile_context>

<pallas_src>
import jax
import jax.numpy as jnp
from jax import lax
from jax.experimental import pallas as pl
from jax.experimental.pallas import tpu as pltpu


def _round_up(n, m):
    return ((n + m - 1) // m) * m


def gru_seq_kernel(x_ref, h0_ref, wxT_ref, whT_ref, bi_ref, woT_ref, bo_ref,
                   out_ref, hT_ref, xh_scr):
    # grid = (batch_tiles, time_blocks); time axis is sequential ("arbitrary").
    tb = pl.program_id(1)

    @pl.when(tb == 0)
    def _():
        # (re)load the initial hidden state for this batch tile; hT_ref is the
        # carry (its block index is constant over the time axis -> resident).
        hT_ref[...] = h0_ref[...]

    ts, tbatch, obs = x_ref.shape
    nh_p = whT_ref.shape[0]
    w_dt = whT_ref.dtype          # f32, or bf16 when use_bf16_weights=True

    # (1) Hoisted input projection for the whole time block: one dense GEMM.
    x_blk = x_ref[...].reshape(ts * tbatch, obs).astype(w_dt)
    xp = (jnp.dot(x_blk, wxT_ref[...], preferred_element_type=jnp.float32)
          + bi_ref[...])                                   # (TS*TB, NHp)
    xh_scr[...] = xp.reshape(ts, tbatch, nh_p)

    whT = whT_ref[...]            # hoisted; stays in vregs/VMEM for the loop

    # (2) Sequential recurrence over the time block (short, fully unrolled).
    def step(s, h):
        pre = xh_scr[s] + jnp.dot(h.astype(w_dt), whT,
                                  preferred_element_type=jnp.float32)
        # single EUP transcendental per step (stable for any |pre|):
        ap = jnp.abs(pre)
        e = jnp.exp(-ap)                       # in (0, 1]
        e2 = e * e
        s_pos = 1.0 / (1.0 + e)                # sigmoid(|pre|)
        t_pos = (1.0 - e2) / (1.0 + e2)        # tanh(|pre|)
        pos = pre >= 0.0
        z = jnp.where(pos, s_pos, 1.0 - s_pos)      # sigmoid(pre) (== r)
        h_hat = jnp.where(pos, t_pos, -t_pos)       # tanh(pre)
        # TODO(synk): reference also builds combined2 = cat(x, r*h) but never
        # uses it (dead code), so it is intentionally not materialized here.
        h_new = z * h + (1.0 - z) * h_hat
        xh_scr[s] = h_new          # reuse the xp slot (already consumed)
        return h_new

    h_final = lax.fori_loop(0, ts, step, hT_ref[...], unroll=True)
    hT_ref[...] = h_final.astype(hT_ref.dtype)

    # (3) Batched output projection for the whole time block.
    hs = xh_scr[...].reshape(ts * tbatch, nh_p).astype(w_dt)
    out = (jnp.dot(hs, woT_ref[...], preferred_element_type=jnp.float32)
           + bo_ref[...])                                  # (TS*TB, ODp)
    out_ref[...] = out.reshape(ts, tbatch, -1).astype(out_ref.dtype)


def gru_sequence(x_seq, h0, w_i2h, b_i2h, w_h2o, b_h2o, *,
                 batch_tile=None, time_tile=None, use_bf16_weights=False):
    """Run the GRU cell over a whole sequence in one fused Pallas kernel.

    x_seq: (T, B, obs_dim), h0: (B, nhidden)
    -> outs: (T, B, out_dim), h_final: (B, nhidden)
    """
    T, B, obs_dim = x_seq.shape
    nhidden = h0.shape[1]
    out_dim = w_h2o.shape[0]

    # ---- tile selection ----------------------------------------------------
    if batch_tile is None:
        batch_tile = min(B, 128)          # MXU-row dense when callers batch >= 128
    batch_tile = min(batch_tile, B)
    while B % batch_tile:
        batch_tile -= 1
    nb = B // batch_tile

    if time_tile is None:
        time_tile = min(T, 16)            # amortize per-grid-step overhead
    time_tile = min(time_tile, T)
    while T % time_tile:
        time_tile -= 1
    nt = T // time_tile

    # Lane-dense padded feature dims (128-wide stores / full vregs).
    nh_p = _round_up(nhidden, 128)
    od_p = _round_up(out_dim, 128)

    # ---- one-time weight prep (amortized over the whole sequence) ----------
    w_dt = jnp.bfloat16 if use_bf16_weights else jnp.float32
    w_ix = w_i2h[:, :obs_dim]                     # (nhidden, obs_dim)
    w_ih = w_i2h[:, obs_dim:]                     # (nhidden, nhidden)
    wxT = jnp.pad(w_ix.T, ((0, 0), (0, nh_p - nhidden))).astype(w_dt)
    whT = jnp.pad(w_ih.T, ((0, nh_p - nhidden), (0, nh_p - nhidden))).astype(w_dt)
    bi = jnp.pad(b_i2h, (0, nh_p - nhidden)).reshape(1, nh_p).astype(jnp.float32)
    woT = jnp.pad(w_h2o.T, ((0, nh_p - nhidden), (0, od_p - out_dim))).astype(w_dt)
    bo = jnp.pad(b_h2o, (0, od_p - out_dim)).reshape(1, od_p).astype(jnp.float32)
    h0p = jnp.pad(h0, ((0, 0), (0, nh_p - nhidden))).astype(jnp.float32)
    # Zero padding is inert: pre[:, pad]=0 -> z=0.5, h_hat=0 -> h_new[:, pad]=0.

    out_p, hT_p = pl.pallas_call(
        gru_seq_kernel,
        out_shape=(
            jax.ShapeDtypeStruct((T, B, od_p), jnp.float32),
            jax.ShapeDtypeStruct((B, nh_p), jnp.float32),
        ),
        grid_spec=pltpu.PrefetchScalarGridSpec(
            num_scalar_prefetch=0,
            grid=(nb, nt),
            in_specs=[
                pl.BlockSpec((time_tile, batch_tile, obs_dim),
                             lambda b, t: (t, b, 0)),
                pl.BlockSpec((batch_tile, nh_p), lambda b, t: (b, 0)),
                # Resident weights (constant index -> fetched once, reused).
                pl.BlockSpec((obs_dim, nh_p), lambda b, t: (0, 0)),
                pl.BlockSpec((nh_p, nh_p), lambda b, t: (0, 0)),
                pl.BlockSpec((1, nh_p), lambda b, t: (0, 0)),
                pl.BlockSpec((nh_p, od_p), lambda b, t: (0, 0)),
                pl.BlockSpec((1, od_p), lambda b, t: (0, 0)),
            ],
            out_specs=(
                pl.BlockSpec((time_tile, batch_tile, od_p),
                             lambda b, t: (t, b, 0)),
                pl.BlockSpec((batch_tile, nh_p), lambda b, t: (b, 0)),
            ),
            scratch_shapes=[
                pltpu.VMEM((time_tile, batch_tile, nh_p), jnp.float32),
            ],
        ),
        compiler_params=pltpu.CompilerParams(
            dimension_semantics=("parallel", "arbitrary"),
            # Raise v5e's 16 MiB default scoped VMEM; safe on all generations.
            # For large nhidden / time_tile, size this from the real footprint.
            vmem_limit_bytes=32 * 1024 * 1024,
        ),
    )(x_seq, h0p, wxT, whT, bi, woT, bo)

    # Strip the lane padding (consumer-side slice; the kernel keeps padded,
    # lane-dense stores).
    return out_p[:, :, :out_dim], hT_p[:, :nhidden]


def gru_forward(x, h, w_i2h, b_i2h, w_h2o, b_h2o):
    """Single-step, unbatched forward matching the PyTorch module exactly.
    x: (obs_dim,), h: (nhidden,) -> (out: (out_dim,), h_new: (nhidden,))."""
    outs, h_new = gru_sequence(x[None, None, :], h[None, :],
                               w_i2h, b_i2h, w_h2o, b_h2o,
                               batch_tile=1, time_tile=1)
    return outs[0, 0], h_new[0]


def init_params(key, obs_dim, nhidden, out_dim):
    """PyTorch-style nn.Linear init: U(-1/sqrt(fan_in), 1/sqrt(fan_in))."""
    k1, k2, k3, k4 = jax.random.split(key, 4)
    fan_i2h = obs_dim + nhidden
    bound_i = 1.0 / jnp.sqrt(fan_i2h)
    bound_o = 1.0 / jnp.sqrt(nhidden)
    w_i2h = jax.random.uniform(k1, (nhidden, fan_i2h), jnp.float32, -bound_i, bound_i)
    b_i2h = jax.random.uniform(k2, (nhidden,), jnp.float32, -bound_i, bound_i)
    w_h2o = jax.random.uniform(k3, (out_dim, nhidden), jnp.float32, -bound_o, bound_o)
    b_h2o = jax.random.uniform(k4, (out_dim,), jnp.float32, -bound_o, bound_o)
    return w_i2h, b_i2h, w_h2o, b_h2o


if __name__ == "__main__":
    obs_dim, nhidden, out_dim = 8, 32, 8
    T, B = 16, 32

    key = jax.random.PRNGKey(0)
    kp, kx, kh = jax.random.split(key, 3)
    w_i2h, b_i2h, w_h2o, b_h2o = init_params(kp, obs_dim, nhidden, out_dim)
    x_seq = jax.random.normal(kx, (T, B, obs_dim), jnp.float32)
    h0 = jax.random.normal(kh, (B, nhidden), jnp.float32)

    # Fused sequence kernel: 2 batch tiles x 2 time blocks of 8 steps each
    # (exercises the h-carry across time blocks and the re-init per batch tile).
    seq_fn = jax.jit(gru_sequence,
                     static_argnames=("batch_tile", "time_tile", "use_bf16_weights"))
    outs, h_T = seq_fn(x_seq, h0, w_i2h, b_i2h, w_h2o, b_h2o,
                       batch_tile=16, time_tile=8)
    jax.block_until_ready((outs, h_T))

    # Pure-JAX reference (mirrors the PyTorch forward exactly, step by step).
    def ref_step(h, x):
        combined = jnp.concatenate([x, h], axis=-1)
        pre = combined @ w_i2h.T + b_i2h
        z = jax.nn.sigmoid(pre)
        h_hat = jnp.tanh(pre)
        h_new = z * h + (1.0 - z) * h_hat
        return h_new, h_new @ w_h2o.T + b_h2o

    h_ref, outs_ref = lax.scan(ref_step, h0, x_seq)
    assert jnp.allclose(outs, outs_ref, atol=1e-5), "sequence out mismatch"
    assert jnp.allclose(h_T, h_ref, atol=1e-5), "sequence h mismatch"

    # Single-step (module-exact) wrapper check.
    out1, h1 = jax.jit(gru_forward)(x_seq[0, 0], h0[0],
                                    w_i2h, b_i2h, w_h2o, b_h2o)
    jax.block_until_ready((out1, h1))
    comb = jnp.concatenate([x_seq[0, 0], h0[0]])
    pre1 = comb @ w_i2h.T + b_i2h
    z1 = jax.nn.sigmoid(pre1)
    h1_ref = z1 * h0[0] + (1.0 - z1) * jnp.tanh(pre1)
    out1_ref = h1_ref @ w_h2o.T + b_h2o
    assert jnp.allclose(out1, out1_ref, atol=1e-5), "step out mismatch"
    assert jnp.allclose(h1, h1_ref, atol=1e-5), "step h mismatch"

    print("KERNEL_OK")
</pallas_src>

<mosaic_0001>
module attributes {stable_mosaic.version = 11 : i64} {
  func.func @gru_seq_kernel(%arg0: i32, %arg1: i32, %arg2: memref<8x16x8xf32, #tpu.memory_space<vmem>>, %arg3: memref<16x128xf32, #tpu.memory_space<vmem>>, %arg4: memref<8x128xf32, #tpu.memory_space<vmem>>, %arg5: memref<128x128xf32, #tpu.memory_space<vmem>>, %arg6: memref<1x128xf32, #tpu.memory_space<vmem>>, %arg7: memref<128x128xf32, #tpu.memory_space<vmem>>, %arg8: memref<1x128xf32, #tpu.memory_space<vmem>>, %arg9: memref<8x16x128xf32, #tpu.memory_space<vmem>>, %arg10: memref<16x128xf32, #tpu.memory_space<vmem>>, %arg11: memref<8x16x128xf32, #tpu.memory_space<vmem>>) attributes {dimension_semantics = [#tpu.dimension_semantics<parallel>, #tpu.dimension_semantics<arbitrary>], iteration_bounds = array<i64: 2, 2>, scalar_prefetch = 0 : i64, scratch_operands = 1 : i64, tpu.core_type = #tpu.core_type<tc>, window_params = [{transform_indices = @transform_0, window_bounds = array<i64: 8, 16, 8>}, {transform_indices = @transform_1, window_bounds = array<i64: 16, 128>}, {pipeline_mode = #tpu.pipeline_mode<synchronous>, transform_indices = @transform_2, window_bounds = array<i64: 8, 128>}, {pipeline_mode = #tpu.pipeline_mode<synchronous>, transform_indices = @transform_3, window_bounds = array<i64: 128, 128>}, {pipeline_mode = #tpu.pipeline_mode<synchronous>, transform_indices = @transform_4, window_bounds = array<i64: 1, 128>}, {pipeline_mode = #tpu.pipeline_mode<synchronous>, transform_indices = @transform_5, window_bounds = array<i64: 128, 128>}, {pipeline_mode = #tpu.pipeline_mode<synchronous>, transform_indices = @transform_6, window_bounds = array<i64: 1, 128>}, {transform_indices = @transform_7, window_bounds = array<i64: 8, 16, 128>}, {transform_indices = @transform_8, window_bounds = array<i64: 16, 128>}]} {
    %c0_i32 = arith.constant 0 : i32
    %0 = arith.cmpi eq, %arg1, %c0_i32 : i32
    %1 = arith.extui %0 : i1 to i32
    %c0_i32_0 = arith.constant 0 : i32
    %2 = arith.cmpi ne, %1, %c0_i32_0 : i32
    scf.if %2 {
      %c0_140 = arith.constant 0 : index
      %c0_141 = arith.constant 0 : index
      %312 = vector.load %arg3[%c0_140, %c0_141] : memref<16x128xf32, #tpu.memory_space<vmem>>, vector<16x128xf32>
      %c0_142 = arith.constant 0 : index
      %c0_143 = arith.constant 0 : index
      %313 = vector.load %arg10[%c0_142, %c0_143] : memref<16x128xf32, #tpu.memory_space<vmem>>, vector<16x128xf32>
      tpu.vector_store %arg10[%c0_142, %c0_143], %312 {strides = array<i32>} : memref<16x128xf32, #tpu.memory_space<vmem>>, vector<16x128xf32>,
    } else {
    }
    %c0 = arith.constant 0 : index
    %c0_1 = arith.constant 0 : index
    %c0_2 = arith.constant 0 : index
    %3 = vector.load %arg2[%c0, %c0_1, %c0_2] : memref<8x16x8xf32, #tpu.memory_space<vmem>>, vector<8x16x8xf32>
    %4 = vector.shape_cast %3 : vector<8x16x8xf32> to vector<128x8xf32>
    %c0_3 = arith.constant 0 : index
    %c0_4 = arith.constant 0 : index
    %5 = vector.load %arg4[%c0_3, %c0_4] : memref<8x128xf32, #tpu.memory_space<vmem>>, vector<8x128xf32>
    %cst = arith.constant dense<0.000000e+00> : vector<128x128xf32>
    %6 = tpu.matmul %4, %5, %cst {dimension_numbers = #tpu.dot_dimension_numbers<[1], [0], [0], [1], [0, 0, 1, 1], [], []>} : vector<128x8xf32>, vector<8x128xf32>, vector<128x128xf32> -> vector<128x128xf32>
    %c0_5 = arith.constant 0 : index
    %c0_6 = arith.constant 0 : index
    %7 = vector.load %arg6[%c0_5, %c0_6] : memref<1x128xf32, #tpu.memory_space<vmem>>, vector<1x128xf32>
    %8 = vector.broadcast %7 : vector<1x128xf32> to vector<128x128xf32>
    %9 = arith.addf %6, %8 : vector<128x128xf32>
    %10 = vector.shape_cast %9 : vector<128x128xf32> to vector<8x16x128xf32>
    %c0_7 = arith.constant 0 : index
    %c0_8 = arith.constant 0 : index
    %c0_9 = arith.constant 0 : index
    %11 = vector.load %arg11[%c0_7, %c0_8, %c0_9] : memref<8x16x128xf32, #tpu.memory_space<vmem>>, vector<8x16x128xf32>
    tpu.vector_store %arg11[%c0_7, %c0_8, %c0_9], %10 {strides = array<i32>} : memref<8x16x128xf32, #tpu.memory_space<vmem>>, vector<8x16x128xf32>,
    %c0_10 = arith.constant 0 : index
    %c0_11 = arith.constant 0 : index
    %12 = vector.load %arg5[%c0_10, %c0_11] : memref<128x128xf32, #tpu.memory_space<vmem>>, vector<128x128xf32>
    %c0_12 = arith.constant 0 : index
    %c0_13 = arith.constant 0 : index
    %13 = vector.load %arg10[%c0_12, %c0_13] : memref<16x128xf32, #tpu.memory_space<vmem>>, vector<16x128xf32>
    %c0_i32_14 = arith.constant 0 : i32
    %14 = arith.index_cast %c0_i32_14 : i32 to index
    %c0_15 = arith.constant 0 : index
    %c0_16 = arith.constant 0 : index
    %15 = vector.load %arg11[%14, %c0_15, %c0_16] : memref<8x16x128xf32, #tpu.memory_space<vmem>>, vector<1x16x128xf32>
    %16 = vector.shape_cast %15 : vector<1x16x128xf32> to vector<16x128xf32>
    %cst_17 = arith.constant dense<0.000000e+00> : vector<16x128xf32>
    %17 = tpu.matmul %13, %12, %cst_17 {dimension_numbers = #tpu.dot_dimension_numbers<[1], [0], [0], [1], [0, 0, 1, 1], [], []>} : vector<16x128xf32>, vector<128x128xf32>, vector<16x128xf32> -> vector<16x128xf32>
    %18 = arith.addf %16, %17 : vector<16x128xf32>
    %19 = math.absf %18 : vector<16x128xf32>
    %cst_18 = arith.constant 0.000000e+00 : f32
    %20 = vector.broadcast %cst_18 : f32 to vector<16x128xf32>
    %21 = arith.subf %20, %19 : vector<16x128xf32>
    %22 = math.exp %21 : vector<16x128xf32>
    %23 = arith.mulf %22, %22 : vector<16x128xf32>
    %cst_19 = arith.constant 1.000000e+00 : f32
    %24 = vector.broadcast %cst_19 : f32 to vector<16x128xf32>
    %25 = arith.addf %24, %22 : vector<16x128xf32>
    %cst_20 = arith.constant 1.000000e+00 : f32
    %26 = vector.broadcast %cst_20 : f32 to vector<16x128xf32>
    %27 = arith.divf %26, %25 : vector<16x128xf32>
    %cst_21 = arith.constant 1.000000e+00 : f32
    %28 = vector.broadcast %cst_21 : f32 to vector<16x128xf32>
    %29 = arith.subf %28, %23 : vector<16x128xf32>
    %cst_22 = arith.constant 1.000000e+00 : f32
    %30 = vector.broadcast %cst_22 : f32 to vector<16x128xf32>
    %31 = arith.addf %30, %23 : vector<16x128xf32>
    %32 = arith.divf %29, %31 : vector<16x128xf32>
    %cst_23 = arith.constant 0.000000e+00 : f32
    %33 = vector.broadcast %cst_23 : f32 to vector<16x128xf32>
    %34 = arith.cmpf oge, %18, %33 : vector<16x128xf32>
    %cst_24 = arith.constant 1.000000e+00 : f32
    %35 = vector.broadcast %cst_24 : f32 to vector<16x128xf32>
    %36 = arith.subf %35, %27 : vector<16x128xf32>
    %37 = arith.select %34, %27, %36 : vector<16x128xi1>, vector<16x128xf32>
    %cst_25 = arith.constant 0.000000e+00 : f32
    %38 = vector.broadcast %cst_25 : f32 to vector<16x128xf32>
    %39 = arith.subf %38, %32 : vector<16x128xf32>
    %40 = arith.select %34, %32, %39 : vector<16x128xi1>, vector<16x128xf32>
    %41 = arith.mulf %37, %13 : vector<16x128xf32>
    %cst_26 = arith.constant 1.000000e+00 : f32
    %42 = vector.broadcast %cst_26 : f32 to vector<16x128xf32>
    %43 = arith.subf %42, %37 : vector<16x128xf32>
    %44 = arith.mulf %43, %40 : vector<16x128xf32>
    %45 = arith.addf %41, %44 : vector<16x128xf32>
    %46 = arith.index_cast %c0_i32_14 : i32 to index
    %c0_27 = arith.constant 0 : index
    %c0_28 = arith.constant 0 : index
    %47 = vector.load %arg11[%46, %c0_27, %c0_28] : memref<8x16x128xf32, #tpu.memory_space<vmem>>, vector<1x16x128xf32>
    %48 = vector.shape_cast %47 : vector<1x16x128xf32> to vector<16x128xf32>
    %49 = vector.shape_cast %45 : vector<16x128xf32> to vector<1x16x128xf32>
    tpu.vector_store %arg11[%46, %c0_27, %c0_28], %49 {strides = array<i32>} : memref<8x16x128xf32, #tpu.memory_space<vmem>>, vector<1x16x128xf32>,
    %c1_i32 = arith.constant 1 : i32
    %50 = arith.index_cast %c1_i32 : i32 to index
    %c0_29 = arith.constant 0 : index
    %c0_30 = arith.constant 0 : index
    %51 = vector.load %arg11[%50, %c0_29, %c0_30] : memref<8x16x128xf32, #tpu.memory_space<vmem>>, vector<1x16x128xf32>
    %52 = vector.shape_cast %51 : vector<1x16x128xf32> to vector<16x128xf32>
    %cst_31 = arith.constant dense<0.000000e+00> : vector<16x128xf32>
    %53 = tpu.matmul %45, %12, %cst_31 {dimension_numbers = #tpu.dot_dimension_numbers<[1], [0], [0], [1], [0, 0, 1, 1], [], []>} : vector<16x128xf32>, vector<128x128xf32>, vector<16x128xf32> -> vector<16x128xf32>
    %54 = arith.addf %52, %53 : vector<16x128xf32>
    %55 = math.absf %54 : vector<16x128xf32>
    %cst_32 = arith.constant 0.000000e+00 : f32
    %56 = vector.broadcast %cst_32 : f32 to vector<16x128xf32>
    %57 = arith.subf %56, %55 : vector<16x128xf32>
    %58 = math.exp %57 : vector<16x128xf32>
    %59 = arith.mulf %58, %58 : vector<16x128xf32>
    %cst_33 = arith.constant 1.000000e+00 : f32
    %60 = vector.broadcast %cst_33 : f32 to vector<16x128xf32>
    %61 = arith.addf %60, %58 : vector<16x128xf32>
    %cst_34 = arith.constant 1.000000e+00 : f32
    %62 = vector.broadcast %cst_34 : f32 to vector<16x128xf32>
    %63 = arith.divf %62, %61 : vector<16x128xf32>
    %cst_35 = arith.constant 1.000000e+00 : f32
    %64 = vector.broadcast %cst_35 : f32 to vector<16x128xf32>
    %65 = arith.subf %64, %59 : vector<16x128xf32>
    %cst_36 = arith.constant 1.000000e+00 : f32
    %66 = vector.broadcast %cst_36 : f32 to vector<16x128xf32>
    %67 = arith.addf %66, %59 : vector<16x128xf32>
    %68 = arith.divf %65, %67 : vector<16x128xf32>
    %cst_37 = arith.constant 0.000000e+00 : f32
    %69 = vector.broadcast %cst_37 : f32 to vector<16x128xf32>
    %70 = arith.cmpf oge, %54, %69 : vector<16x128xf32>
    %cst_38 = arith.constant 1.000000e+00 : f32
    %71 = vector.broadcast %cst_38 : f32 to vector<16x128xf32>
    %72 = arith.subf %71, %63 : vector<16x128xf32>
    %73 = arith.select %70, %63, %72 : vector<16x128xi1>, vector<16x128xf32>
    %cst_39 = arith.constant 0.000000e+00 : f32
    %74 = vector.broadcast %cst_39 : f32 to vector<16x128xf32>
    %75 = arith.subf %74, %68 : vector<16x128xf32>
    %76 = arith.select %70, %68, %75 : vector<16x128xi1>, vector<16x128xf32>
    %77 = arith.mulf %73, %45 : vector<16x128xf32>
    %cst_40 = arith.constant 1.000000e+00 : f32
    %78 = vector.broadcast %cst_40 : f32 to vector<16x128xf32>
    %79 = arith.subf %78, %73 : vector<16x128xf32>
    %80 = arith.mulf %79, %76 : vector<16x128xf32>
    %81 = arith.addf %77, %80 : vector<16x128xf32>
    %82 = arith.index_cast %c1_i32 : i32 to index
    %c0_41 = arith.constant 0 : index
    %c0_42 = arith.constant 0 : index
    %83 = vector.load %arg11[%82, %c0_41, %c0_42] : memref<8x16x128xf32, #tpu.memory_space<vmem>>, vector<1x16x128xf32>
    %84 = vector.shape_cast %83 : vector<1x16x128xf32> to vector<16x128xf32>
    %85 = vector.shape_cast %81 : vector<16x128xf32> to vector<1x16x128xf32>
    tpu.vector_store %arg11[%82, %c0_41, %c0_42], %85 {strides = array<i32>} : memref<8x16x128xf32, #tpu.memory_space<vmem>>, vector<1x16x128xf32>,
    %c2_i32 = arith.constant 2 : i32
    %86 = arith.index_cast %c2_i32 : i32 to index
    %c0_43 = arith.constant 0 : index
    %c0_44 = arith.constant 0 : index
    %87 = vector.load %arg11[%86, %c0_43, %c0_44] : memref<8x16x128xf32, #tpu.memory_space<vmem>>, vector<1x16x128xf32>
    %88 = vector.shape_cast %87 : vector<1x16x128xf32> to vector<16x128xf32>
    %cst_45 = arith.constant dense<0.000000e+00> : vector<16x128xf32>
    %89 = tpu.matmul %81, %12, %cst_45 {dimension_numbers = #tpu.dot_dimension_numbers<[1], [0], [0], [1], [0, 0, 1, 1], [], []>} : vector<16x128xf32>, vector<128x128xf32>, vector<16x128xf32> -> vector<16x128xf32>
    %90 = arith.addf %88, %89 : vector<16x128xf32>
    %91 = math.absf %90 : vector<16x128xf32>
    %cst_46 = arith.constant 0.000000e+00 : f32
    %92 = vector.broadcast %cst_46 : f32 to vector<16x128xf32>
    %93 = arith.subf %92, %91 : vector<16x128xf32>
    %94 = math.exp %93 : vector<16x128xf32>
    %95 = arith.mulf %94, %94 : vector<16x128xf32>
    %cst_47 = arith.constant 1.000000e+00 : f32
    %96 = vector.broadcast %cst_47 : f32 to vector<16x128xf32>
    %97 = arith.addf %96, %94 : vector<16x128xf32>
    %cst_48 = arith.constant 1.000000e+00 : f32
    %98 = vector.broadcast %cst_48 : f32 to vector<16x128xf32>
    %99 = arith.divf %98, %97 : vector<16x128xf32>
    %cst_49 = arith.constant 1.000000e+00 : f32
    %100 = vector.broadcast %cst_49 : f32 to vector<16x128xf32>
    %101 = arith.subf %100, %95 : vector<16x128xf32>
    %cst_50 = arith.constant 1.000000e+00 : f32
    %102 = vector.broadcast %cst_50 : f32 to vector<16x128xf32>
    %103 = arith.addf %102, %95 : vector<16x128xf32>
    %104 = arith.divf %101, %103 : vector<16x128xf32>
    %cst_51 = arith.constant 0.000000e+00 : f32
    %105 = vector.broadcast %cst_51 : f32 to vector<16x128xf32>
    %106 = arith.cmpf oge, %90, %105 : vector<16x128xf32>
    %cst_52 = arith.constant 1.000000e+00 : f32
    %107 = vector.broadcast %cst_52 : f32 to vector<16x128xf32>
    %108 = arith.subf %107, %99 : vector<16x128xf32>
    %109 = arith.select %106, %99, %108 : vector<16x128xi1>, vector<16x128xf32>
    %cst_53 = arith.constant 0.000000e+00 : f32
    %110 = vector.broadcast %cst_53 : f32 to vector<16x128xf32>
    %111 = arith.subf %110, %104 : vector<16x128xf32>
    %112 = arith.select %106, %104, %111 : vector<16x128xi1>, vector<16x128xf32>
    %113 = arith.mulf %109, %81 : vector<16x128xf32>
    %cst_54 = arith.constant 1.000000e+00 : f32
    %114 = vector.broadcast %cst_54 : f32 to vector<16x128xf32>
    %115 = arith.subf %114, %109 : vector<16x128xf32>
    %116 = arith.mulf %115, %112 : vector<16x128xf32>
    %117 = arith.addf %113, %116 : vector<16x128xf32>
    %118 = arith.index_cast %c2_i32 : i32 to index
    %c0_55 = arith.constant 0 : index
    %c0_56 = arith.constant 0 : index
    %119 = vector.load %arg11[%118, %c0_55, %c0_56] : memref<8x16x128xf32, #tpu.memory_space<vmem>>, vector<1x16x128xf32>
    %120 = vector.shape_cast %119 : vector<1x16x128xf32> to vector<16x128xf32>
    %121 = vector.shape_cast %117 : vector<16x128xf32> to vector<1x16x128xf32>
    tpu.vector_store %arg11[%118, %c0_55, %c0_56], %121 {strides = array<i32>} : memref<8x16x128xf32, #tpu.memory_space<vmem>>, vector<1x16x128xf32>,
    %c3_i32 = arith.constant 3 : i32
    %122 = arith.index_cast %c3_i32 : i32 to index
    %c0_57 = arith.constant 0 : index
    %c0_58 = arith.constant 0 : index
    %123 = vector.load %arg11[%122, %c0_57, %c0_58] : memref<8x16x128xf32, #tpu.memory_space<vmem>>, vector<1x16x128xf32>
    %124 = vector.shape_cast %123 : vector<1x16x128xf32> to vector<16x128xf32>
    %cst_59 = arith.constant dense<0.000000e+00> : vector<16x128xf32>
    %125 = tpu.matmul %117, %12, %cst_59 {dimension_numbers = #tpu.dot_dimension_numbers<[1], [0], [0], [1], [0, 0, 1, 1], [], []>} : vector<16x128xf32>, vector<128x128xf32>, vector<16x128xf32> -> vector<16x128xf32>
    %126 = arith.addf %124, %125 : vector<16x128xf32>
    %127 = math.absf %126 : vector<16x128xf32>
    %cst_60 = arith.constant 0.000000e+00 : f32
    %128 = vector.broadcast %cst_60 : f32 to vector<16x128xf32>
    %129 = arith.subf %128, %127 : vector<16x128xf32>
    %130 = math.exp %129 : vector<16x128xf32>
    %131 = arith.mulf %130, %130 : vector<16x128xf32>
    %cst_61 = arith.constant 1.000000e+00 : f32
    %132 = vector.broadcast %cst_61 : f32 to vector<16x128xf32>
    %133 = arith.addf %132, %130 : vector<16x128xf32>
    %cst_62 = arith.constant 1.000000e+00 : f32
    %134 = vector.broadcast %cst_62 : f32 to vector<16x128xf32>
    %135 = arith.divf %134, %133 : vector<16x128xf32>
    %cst_63 = arith.constant 1.000000e+00 : f32
    %136 = vector.broadcast %cst_63 : f32 to vector<16x128xf32>
    %137 = arith.subf %136, %131 : vector<16x128xf32>
    %cst_64 = arith.constant 1.000000e+00 : f32
    %138 = vector.broadcast %cst_64 : f32 to vector<16x128xf32>
    %139 = arith.addf %138, %131 : vector<16x128xf32>
    %140 = arith.divf %137, %139 : vector<16x128xf32>
    %cst_65 = arith.constant 0.000000e+00 : f32
    %141 = vector.broadcast %cst_65 : f32 to vector<16x128xf32>
    %142 = arith.cmpf oge, %126, %141 : vector<16x128xf32>
    %cst_66 = arith.constant 1.000000e+00 : f32
    %143 = vector.broadcast %cst_66 : f32 to vector<16x128xf32>
    %144 = arith.subf %143, %135 : vector<16x128xf32>
    %145 = arith.select %142, %135, %144 : vector<16x128xi1>, vector<16x128xf32>
    %cst_67 = arith.constant 0.000000e+00 : f32
    %146 = vector.broadcast %cst_67 : f32 to vector<16x128xf32>
    %147 = arith.subf %146, %140 : vector<16x128xf32>
    %148 = arith.select %142, %140, %147 : vector<16x128xi1>, vector<16x128xf32>
    %149 = arith.mulf %145, %117 : vector<16x128xf32>
    %cst_68 = arith.constant 1.000000e+00 : f32
    %150 = vector.broadcast %cst_68 : f32 to vector<16x128xf32>
    %151 = arith.subf %150, %145 : vector<16x128xf32>
    %152 = arith.mulf %151, %148 : vector<16x128xf32>
    %153 = arith.addf %149, %152 : vector<16x128xf32>
    %154 = arith.index_cast %c3_i32 : i32 to index
    %c0_69 = arith.constant 0 : index
    %c0_70 = arith.constant 0 : index
    %155 = vector.load %arg11[%154, %c0_69, %c0_70] : memref<8x16x128xf32, #tpu.memory_space<vmem>>, vector<1x16x128xf32>
    %156 = vector.shape_cast %155 : vector<1x16x128xf32> to vector<16x128xf32>
    %157 = vector.shape_cast %153 : vector<16x128xf32> to vector<1x16x128xf32>
    tpu.vector_store %arg11[%154, %c0_69, %c0_70], %157 {strides = array<i32>} : memref<8x16x128xf32, #tpu.memory_space<vmem>>, vector<1x16x128xf32>,
    %c4_i32 = arith.constant 4 : i32
    %158 = arith.index_cast %c4_i32 : i32 to index
    %c0_71 = arith.constant 0 : index
    %c0_72 = arith.constant 0 : index
    %159 = vector.load %arg11[%158, %c0_71, %c0_72] : memref<8x16x128xf32, #tpu.memory_space<vmem>>, vector<1x16x128xf32>
    %160 = vector.shape_cast %159 : vector<1x16x128xf32> to vector<16x128xf32>
    %cst_73 = arith.constant dense<0.000000e+00> : vector<16x128xf32>
    %161 = tpu.matmul %153, %12, %cst_73 {dimension_numbers = #tpu.dot_dimension_numbers<[1], [0], [0], [1], [0, 0, 1, 1], [], []>} : vector<16x128xf32>, vector<128x128xf32>, vector<16x128xf32> -> vector<16x128xf32>
    %162 = arith.addf %160, %161 : vector<16x128xf32>
    %163 = math.absf %162 : vector<16x128xf32>
    %cst_74 = arith.constant 0.000000e+00 : f32
    %164 = vector.broadcast %cst_74 : f32 to vector<16x128xf32>
    %165 = arith.subf %164, %163 : vector<16x128xf32>
    %166 = math.exp %165 : vector<16x128xf32>
    %167 = arith.mulf %166, %166 : vector<16x128xf32>
    %cst_75 = arith.constant 1.000000e+00 : f32
    %168 = vector.broadcast %cst_75 : f32 to vector<16x128xf32>
    %169 = arith.addf %168, %166 : vector<16x128xf32>
    %cst_76 = arith.constant 1.000000e+00 : f32
    %170 = vector.broadcast %cst_76 : f32 to vector<16x128xf32>
    %171 = arith.divf %170, %169 : vector<16x128xf32>
    %cst_77 = arith.constant 1.000000e+00 : f32
    %172 = vector.broadcast %cst_77 : f32 to vector<16x128xf32>
    %173 = arith.subf %172, %167 : vector<16x128xf32>
    %cst_78 = arith.constant 1.000000e+00 : f32
    %174 = vector.broadcast %cst_78 : f32 to vector<16x128xf32>
    %175 = arith.addf %174, %167 : vector<16x128xf32>
    %176 = arith.divf %173, %175 : vector<16x128xf32>
    %cst_79 = arith.constant 0.000000e+00 : f32
    %177 = vector.broadcast %cst_79 : f32 to vector<16x128xf32>
    %178 = arith.cmpf oge, %162, %177 : vector<16x128xf32>
    %cst_80 = arith.constant 1.000000e+00 : f32
    %179 = vector.broadcast %cst_80 : f32 to vector<16x128xf32>
    %180 = arith.subf %179, %171 : vector<16x128xf32>
    %181 = arith.select %178, %171, %180 : vector<16x128xi1>, vector<16x128xf32>
    %cst_81 = arith.constant 0.000000e+00 : f32
    %182 = vector.broadcast %cst_81 : f32 to vector<16x128xf32>
    %183 = arith.subf %182, %176 : vector<16x128xf32>
    %184 = arith.select %178, %176, %183 : vector<16x128xi1>, vector<16x128xf32>
    %185 = arith.mulf %181, %153 : vector<16x128xf32>
    %cst_82 = arith.constant 1.000000e+00 : f32
    %186 = vector.broadcast %cst_82 : f32 to vector<16x128xf32>
    %187 = arith.subf %186, %181 : vector<16x128xf32>
    %188 = arith.mulf %187, %184 : vector<16x128xf32>
    %189 = arith.addf %185, %188 : vector<16x128xf32>
    %190 = arith.index_cast %c4_i32 : i32 to index
    %c0_83 = arith.constant 0 : index
    %c0_84 = arith.constant 0 : index
    %191 = vector.load %arg11[%190, %c0_83, %c0_84] : memref<8x16x128xf32, #tpu.memory_space<vmem>>, vector<1x16x128xf32>
    %192 = vector.shape_cast %191 : vector<1x16x128xf32> to vector<16x128xf32>
    %193 = vector.shape_cast %189 : vector<16x128xf32> to vector<1x16x128xf32>
    tpu.vector_store %arg11[%190, %c0_83, %c0_84], %193 {strides = array<i32>} : memref<8x16x128xf32, #tpu.memory_space<vmem>>, vector<1x16x128xf32>,
    %c5_i32 = arith.constant 5 : i32
    %194 = arith.index_cast %c5_i32 : i32 to index
    %c0_85 = arith.constant 0 : index
    %c0_86 = arith.constant 0 : index
    %195 = vector.load %arg11[%194, %c0_85, %c0_86] : memref<8x16x128xf32, #tpu.memory_space<vmem>>, vector<1x16x128xf32>
    %196 = vector.shape_cast %195 : vector<1x16x128xf32> to vector<16x128xf32>
    %cst_87 = arith.constant dense<0.000000e+00> : vector<16x128xf32>
    %197 = tpu.matmul %189, %12, %cst_87 {dimension_numbers = #tpu.dot_dimension_numbers<[1], [0], [0], [1], [0, 0, 1, 1], [], []>} : vector<16x128xf32>, vector<128x128xf32>, vector<16x128xf32> -> vector<16x128xf32>
    %198 = arith.addf %196, %197 : vector<16x128xf32>
    %199 = math.absf %198 : vector<16x128xf32>
    %cst_88 = arith.constant 0.000000e+00 : f32
    %200 = vector.broadcast %cst_88 : f32 to vector<16x128xf32>
    %201 = arith.subf %200, %199 : vector<16x128xf32>
    %202 = math.exp %201 : vector<16x128xf32>
    %203 = arith.mulf %202, %202 : vector<16x128xf32>
    %cst_89 = arith.constant 1.000000e+00 : f32
    %204 = vector.broadcast %cst_89 : f32 to vector<16x128xf32>
    %205 = arith.addf %204, %202 : vector<16x128xf32>
    %cst_90 = arith.constant 1.000000e+00 : f32
    %206 = vector.broadcast %cst_90 : f32 to vector<16x128xf32>
    %207 = arith.divf %206, %205 : vector<16x128xf32>
    %cst_91 = arith.constant 1.000000e+00 : f32
    %208 = vector.broadcast %cst_91 : f32 to vector<16x128xf32>
    %209 = arith.subf %208, %203 : vector<16x128xf32>
    %cst_92 = arith.constant 1.000000e+00 : f32
    %210 = vector.broadcast %cst_92 : f32 to vector<16x128xf32>
    %211 = arith.addf %210, %203 : vector<16x128xf32>
    %212 = arith.divf %209, %211 : vector<16x128xf32>
    %cst_93 = arith.constant 0.000000e+00 : f32
    %213 = vector.broadcast %cst_93 : f32 to vector<16x128xf32>
    %214 = arith.cmpf oge, %198, %213 : vector<16x128xf32>
    %cst_94 = arith.constant 1.000000e+00 : f32
    %215 = vector.broadcast %cst_94 : f32 to vector<16x128xf32>
    %216 = arith.subf %215, %207 : vector<16x128xf32>
    %217 = arith.select %214, %207, %216 : vector<16x128xi1>, vector<16x128xf32>
    %cst_95 = arith.constant 0.000000e+00 : f32
    %218 = vector.broadcast %cst_95 : f32 to vector<16x128xf32>
    %219 = arith.subf %218, %212 : vector<16x128xf32>
    %220 = arith.select %214, %212, %219 : vector<16x128xi1>, vector<16x128xf32>
    %221 = arith.mulf %217, %189 : vector<16x128xf32>
    %cst_96 = arith.constant 1.000000e+00 : f32
    %222 = vector.broadcast %cst_96 : f32 to vector<16x128xf32>
    %223 = arith.subf %222, %217 : vector<16x128xf32>
    %224 = arith.mulf %223, %220 : vector<16x128xf32>
    %225 = arith.addf %221, %224 : vector<16x128xf32>
    %226 = arith.index_cast %c5_i32 : i32 to index
    %c0_97 = arith.constant 0 : index
    %c0_98 = arith.constant 0 : index
    %227 = vector.load %arg11[%226, %c0_97, %c0_98] : memref<8x16x128xf32, #tpu.memory_space<vmem>>, vector<1x16x128xf32>
    %228 = vector.shape_cast %227 : vector<1x16x128xf32> to vector<16x128xf32>
    %229 = vector.shape_cast %225 : vector<16x128xf32> to vector<1x16x128xf32>
    tpu.vector_store %arg11[%226, %c0_97, %c0_98], %229 {strides = array<i32>} : memref<8x16x128xf32, #tpu.memory_space<vmem>>, vector<1x16x128xf32>,
    %c6_i32 = arith.constant 6 : i32
    %230 = arith.index_cast %c6_i32 : i32 to index
    %c0_99 = arith.constant 0 : index
    %c0_100 = arith.constant 0 : index
    %231 = vector.load %arg11[%230, %c0_99, %c0_100] : memref<8x16x128xf32, #tpu.memory_space<vmem>>, vector<1x16x128xf32>
    %232 = vector.shape_cast %231 : vector<1x16x128xf32> to vector<16x128xf32>
    %cst_101 = arith.constant dense<0.000000e+00> : vector<16x128xf32>
    %233 = tpu.matmul %225, %12, %cst_101 {dimension_numbers = #tpu.dot_dimension_numbers<[1], [0], [0], [1], [0, 0, 1, 1], [], []>} : vector<16x128xf32>, vector<128x128xf32>, vector<16x128xf32> -> vector<16x128xf32>
    %234 = arith.addf %232, %233 : vector<16x128xf32>
    %235 = math.absf %234 : vector<16x128xf32>
    %cst_102 = arith.constant 0.000000e+00 : f32
    %236 = vector.broadcast %cst_102 : f32 to vector<16x128xf32>
    %237 = arith.subf %236, %235 : vector<16x128xf32>
    %238 = math.exp %237 : vector<16x128xf32>
    %239 = arith.mulf %238, %238 : vector<16x128xf32>
    %cst_103 = arith.constant 1.000000e+00 : f32
    %240 = vector.broadcast %cst_103 : f32 to vector<16x128xf32>
    %241 = arith.addf %240, %238 : vector<16x128xf32>
    %cst_104 = arith.constant 1.000000e+00 : f32
    %242 = vector.broadcast %cst_104 : f32 to vector<16x128xf32>
    %243 = arith.divf %242, %241 : vector<16x128xf32>
    %cst_105 = arith.constant 1.000000e+00 : f32
    %244 = vector.broadcast %cst_105 : f32 to vector<16x128xf32>
    %245 = arith.subf %244, %239 : vector<16x128xf32>
    %cst_106 = arith.constant 1.000000e+00 : f32
    %246 = vector.broadcast %cst_106 : f32 to vector<16x128xf32>
    %247 = arith.addf %246, %239 : vector<16x128xf32>
    %248 = arith.divf %245, %247 : vector<16x128xf32>
    %cst_107 = arith.constant 0.000000e+00 : f32
    %249 = vector.broadcast %cst_107 : f32 to vector<16x128xf32>
    %250 = arith.cmpf oge, %234, %249 : vector<16x128xf32>
    %cst_108 = arith.constant 1.000000e+00 : f32
    %251 = vector.broadcast %cst_108 : f32 to vector<16x128xf32>
    %252 = arith.subf %251, %243 : vector<16x128xf32>
    %253 = arith.select %250, %243, %252 : vector<16x128xi1>, vector<16x128xf32>
    %cst_109 = arith.constant 0.000000e+00 : f32
    %254 = vector.broadcast %cst_109 : f32 to vector<16x128xf32>
    %255 = arith.subf %254, %248 : vector<16x128xf32>
    %256 = arith.select %250, %248, %255 : vector<16x128xi1>, vector<16x128xf32>
    %257 = arith.mulf %253, %225 : vector<16x128xf32>
    %cst_110 = arith.constant 1.000000e+00 : f32
    %258 = vector.broadcast %cst_110 : f32 to vector<16x128xf32>
    %259 = arith.subf %258, %253 : vector<16x128xf32>
    %260 = arith.mulf %259, %256 : vector<16x128xf32>
    %261 = arith.addf %257, %260 : vector<16x128xf32>
    %262 = arith.index_cast %c6_i32 : i32 to index
    %c0_111 = arith.constant 0 : index
    %c0_112 = arith.constant 0 : index
    %263 = vector.load %arg11[%262, %c0_111, %c0_112] : memref<8x16x128xf32, #tpu.memory_space<vmem>>, vector<1x16x128xf32>
    %264 = vector.shape_cast %263 : vector<1x16x128xf32> to vector<16x128xf32>
    %265 = vector.shape_cast %261 : vector<16x128xf32> to vector<1x16x128xf32>
    tpu.vector_store %arg11[%262, %c0_111, %c0_112], %265 {strides = array<i32>} : memref<8x16x128xf32, #tpu.memory_space<vmem>>, vector<1x16x128xf32>,
    %c7_i32 = arith.constant 7 : i32
    %266 = arith.index_cast %c7_i32 : i32 to index
    %c0_113 = arith.constant 0 : index
    %c0_114 = arith.constant 0 : index
    %267 = vector.load %arg11[%266, %c0_113, %c0_114] : memref<8x16x128xf32, #tpu.memory_space<vmem>>, vector<1x16x128xf32>
    %268 = vector.shape_cast %267 : vector<1x16x128xf32> to vector<16x128xf32>
    %cst_115 = arith.constant dense<0.000000e+00> : vector<16x128xf32>
    %269 = tpu.matmul %261, %12, %cst_115 {dimension_numbers = #tpu.dot_dimension_numbers<[1], [0], [0], [1], [0, 0, 1, 1], [], []>} : vector<16x128xf32>, vector<128x128xf32>, vector<16x128xf32> -> vector<16x128xf32>
    %270 = arith.addf %268, %269 : vector<16x128xf32>
    %271 = math.absf %270 : vector<16x128xf32>
    %cst_116 = arith.constant 0.000000e+00 : f32
    %272 = vector.broadcast %cst_116 : f32 to vector<16x128xf32>
    %273 = arith.subf %272, %271 : vector<16x128xf32>
    %274 = math.exp %273 : vector<16x128xf32>
    %275 = arith.mulf %274, %274 : vector<16x128xf32>
    %cst_117 = arith.constant 1.000000e+00 : f32
    %276 = vector.broadcast %cst_117 : f32 to vector<16x128xf32>
    %277 = arith.addf %276, %274 : vector<16x128xf32>
    %cst_118 = arith.constant 1.000000e+00 : f32
    %278 = vector.broadcast %cst_118 : f32 to vector<16x128xf32>
    %279 = arith.divf %278, %277 : vector<16x128xf32>
    %cst_119 = arith.constant 1.000000e+00 : f32
    %280 = vector.broadcast %cst_119 : f32 to vector<16x128xf32>
    %281 = arith.subf %280, %275 : vector<16x128xf32>
    %cst_120 = arith.constant 1.000000e+00 : f32
    %282 = vector.broadcast %cst_120 : f32 to vector<16x128xf32>
    %283 = arith.addf %282, %275 : vector<16x128xf32>
    %284 = arith.divf %281, %283 : vector<16x128xf32>
    %cst_121 = arith.constant 0.000000e+00 : f32
    %285 = vector.broadcast %cst_121 : f32 to vector<16x128xf32>
    %286 = arith.cmpf oge, %270, %285 : vector<16x128xf32>
    %cst_122 = arith.constant 1.000000e+00 : f32
    %287 = vector.broadcast %cst_122 : f32 to vector<16x128xf32>
    %288 = arith.subf %287, %279 : vector<16x128xf32>
    %289 = arith.select %286, %279, %288 : vector<16x128xi1>, vector<16x128xf32>
    %cst_123 = arith.constant 0.000000e+00 : f32
    %290 = vector.broadcast %cst_123 : f32 to vector<16x128xf32>
    %291 = arith.subf %290, %284 : vector<16x128xf32>
    %292 = arith.select %286, %284, %291 : vector<16x128xi1>, vector<16x128xf32>
    %293 = arith.mulf %289, %261 : vector<16x128xf32>
    %cst_124 = arith.constant 1.000000e+00 : f32
    %294 = vector.broadcast %cst_124 : f32 to vector<16x128xf32>
    %295 = arith.subf %294, %289 : vector<16x128xf32>
    %296 = arith.mulf %295, %292 : vector<16x128xf32>
    %297 = arith.addf %293, %296 : vector<16x128xf32>
    %298 = arith.index_cast %c7_i32 : i32 to index
    %c0_125 = arith.constant 0 : index
    %c0_126 = arith.constant 0 : index
    %299 = vector.load %arg11[%298, %c0_125, %c0_126] : memref<8x16x128xf32, #tpu.memory_space<vmem>>, vector<1x16x128xf32>
    %300 = vector.shape_cast %299 : vector<1x16x128xf32> to vector<16x128xf32>
    %301 = vector.shape_cast %297 : vector<16x128xf32> to vector<1x16x128xf32>
    tpu.vector_store %arg11[%298, %c0_125, %c0_126], %301 {strides = array<i32>} : memref<8x16x128xf32, #tpu.memory_space<vmem>>, vector<1x16x128xf32>,
    %c8_i32 = arith.constant 8 : i32
    %c0_127 = arith.constant 0 : index
    %c0_128 = arith.constant 0 : index
    %302 = vector.load %arg10[%c0_127, %c0_128] : memref<16x128xf32, #tpu.memory_space<vmem>>, vector<16x128xf32>
    tpu.vector_store %arg10[%c0_127, %c0_128], %297 {strides = array<i32>} : memref<16x128xf32, #tpu.memory_space<vmem>>, vector<16x128xf32>,
    %c0_129 = arith.constant 0 : index
    %c0_130 = arith.constant 0 : index
    %c0_131 = arith.constant 0 : index
    %303 = vector.load %arg11[%c0_129, %c0_130, %c0_131] : memref<8x16x128xf32, #tpu.memory_space<vmem>>, vector<8x16x128xf32>
    %304 = vector.shape_cast %303 : vector<8x16x128xf32> to vector<128x128xf32>
    %c0_132 = arith.constant 0 : index
    %c0_133 = arith.constant 0 : index
    %305 = vector.load %arg7[%c0_132, %c0_133] : memref<128x128xf32, #tpu.memory_space<vmem>>, vector<128x128xf32>
    %cst_134 = arith.constant dense<0.000000e+00> : vector<128x128xf32>
    %306 = tpu.matmul %304, %305, %cst_134 {dimension_numbers = #tpu.dot_dimension_numbers<[1], [0], [0], [1], [0, 0, 1, 1], [], []>} : vector<128x128xf32>, vector<128x128xf32>, vector<128x128xf32> -> vector<128x128xf32>
    %c0_135 = arith.constant 0 : index
    %c0_136 = arith.constant 0 : index
    %307 = vector.load %arg8[%c0_135, %c0_136] : memref<1x128xf32, #tpu.memory_space<vmem>>, vector<1x128xf32>
    %308 = vector.broadcast %307 : vector<1x128xf32> to vector<128x128xf32>
    %309 = arith.addf %306, %308 : vector<128x128xf32>
    %310 = vector.shape_cast %309 : vector<128x128xf32> to vector<8x16x128xf32>
    %c0_137 = arith.constant 0 : index
    %c0_138 = arith.constant 0 : index
    %c0_139 = arith.constant 0 : index
    %311 = vector.load %arg9[%c0_137, %c0_138, %c0_139] : memref<8x16x128xf32, #tpu.memory_space<vmem>>, vector<8x16x128xf32>
    tpu.vector_store %arg9[%c0_137, %c0_138, %c0_139], %310 {strides = array<i32>} : memref<8x16x128xf32, #tpu.memory_space<vmem>>, vector<8x16x128xf32>,
    return
  }
  func.func @transform_0(%arg0: i32, %arg1: i32) -> (i32, i32, i32) {
    %c0_i32 = arith.constant 0 : i32
    %c0_i32_0 = arith.constant 0 : i32
    return %arg1, %arg0, %c0_i32 : i32, i32, i32
  }
  func.func @transform_1(%arg0: i32, %arg1: i32) -> (i32, i32) {
    %c0_i32 = arith.constant 0 : i32
    %c0_i32_0 = arith.constant 0 : i32
    return %arg0, %c0_i32 : i32, i32
  }
  func.func @transform_2(%arg0: i32, %arg1: i32) -> (i32, i32) {
    %c0_i32 = arith.constant 0 : i32
    %c0_i32_0 = arith.constant 0 : i32
    %c0_i32_1 = arith.constant 0 : i32
    return %c0_i32, %c0_i32_0 : i32, i32
  }
  func.func @transform_3(%arg0: i32, %arg1: i32) -> (i32, i32) {
    %c0_i32 = arith.constant 0 : i32
    %c0_i32_0 = arith.constant 0 : i32
    %c0_i32_1 = arith.constant 0 : i32
    return %c0_i32, %c0_i32_0 : i32, i32
  }
  func.func @transform_4(%arg0: i32, %arg1: i32) -> (i32, i32) {
    %c0_i32 = arith.constant 0 : i32
    %c0_i32_0 = arith.constant 0 : i32
    %c0_i32_1 = arith.constant 0 : i32
    return %c0_i32, %c0_i32_0 : i32, i32
  }
  func.func @transform_5(%arg0: i32, %arg1: i32) -> (i32, i32) {
    %c0_i32 = arith.constant 0 : i32
    %c0_i32_0 = arith.constant 0 : i32
    %c0_i32_1 = arith.constant 0 : i32
    return %c0_i32, %c0_i32_0 : i32, i32
  }
  func.func @transform_6(%arg0: i32, %arg1: i32) -> (i32, i32) {
    %c0_i32 = arith.constant 0 : i32
    %c0_i32_0 = arith.constant 0 : i32
    %c0_i32_1 = arith.constant 0 : i32
    return %c0_i32, %c0_i32_0 : i32, i32
  }
  func.func @transform_7(%arg0: i32, %arg1: i32) -> (i32, i32, i32) {
    %c0_i32 = arith.constant 0 : i32
    %c0_i32_0 = arith.constant 0 : i32
    return %arg1, %arg0, %c0_i32 : i32, i32, i32
  }
  func.func @transform_8(%arg0: i32, %arg1: i32) -> (i32, i32) {
    %c0_i32 = arith.constant 0 : i32
    %c0_i32_0 = arith.constant 0 : i32
    return %arg0, %c0_i32 : i32, i32
  }
}

</mosaic_0001>

<llo_original>
// kernel: gru_sequence.1
$region0: #{gru_sequence.1}
  #allocation0 [shape = 'u32[]', space=smem, size = 0x4, offset = 0x4, fixed_abs, tag = 'smem constant byte address 0x4 - core index']
  #allocation1 [shape = 'u32[144,128]{1,0:T(1,128)}', space=vmem, size = 0x12000, scoped, tag = 'internal scratch']
  #allocation2 [shape = 'f32[8,16,128]{2,1,0:T(8,128)}', space=vmem, size = 0x10000, scoped, tag = 'scratch operand']
  %s0 = inlined_call_operand.vmem [shape: f32[16,32,8], index: 0, kind: input, shape index: {}]
  %s1 = inlined_call_operand.vmem [shape: f32[32,128], index: 1, kind: input, shape index: {}]
  %s2 = inlined_call_operand.vmem [shape: f32[8,128], index: 2, kind: input, shape index: {}]
  %s3 = inlined_call_operand.vmem [shape: f32[128,128], index: 3, kind: input, shape index: {}]
  %s4 = inlined_call_operand.vmem [shape: f32[1,128], index: 4, kind: input, shape index: {}]
  %s5 = inlined_call_operand.vmem [shape: f32[128,128], index: 5, kind: input, shape index: {}]
  %s6 = inlined_call_operand.vmem [shape: f32[1,128], index: 6, kind: input, shape index: {}]
  %s7 = inlined_call_operand.vmem [shape: f32[16,32,128], index: 7, kind: output, shape index: {0}]
  %s8 = inlined_call_operand.hbm [shape: f32[32,128], index: 8, kind: output, shape index: {1}]
  %9 = xla_tuple %s7, %s8
  %s10 = sld [smem:[#allocation0]]
  $region145: #{gru_sequence.1} parent=0
    _
  %s12 = ssub.s32 1, %s10
  %s13 = scalar_select 0, %s12, %s10
  $region1: #{gru_sequence.1} parent=0
    #allocation3 [shape = 'u8[131072]{0}', space=vmem, size = 0x20000, scoped, tag = 'input window, operand 0']
    #allocation4 [shape = 'u8[131072]{0}', space=vmem, size = 0x20000, scoped, tag = 'output window, operand 0']
    #allocation5 [shape = 'u8[16384]{0}', space=vmem, size = 0x4000, scoped, tag = 'output window, operand 1']
    #allocation6 [shape = 's32[2]{0}', space=sflag, size = 0x8, scoped, tag = 'scoped memory for gru_sequence.1']
    %14 = vsyncpa [#allocation6], 0
    %s15 = scalar_lea.sflag [#allocation6], 1
    %16 = vsyncpa %s15, 0
    loop: start=0, step=1, limit=6
    $region2: #{gru_sequence.1} parent=1 // loop_pre_header
      _
    $region3: #{gru_sequence.1} parent=1 // loop_header
      %s18 = sphi 0, %s22
      %p19 = scmp.ge.s32.totalorder %s18, 6
      %s25 = sphi 0, %s37
      %s26 = sphi 0, %s33
      %s27 = sphi 0, %s25
      %s28 = sphi 0, %s26
      %s29 = sphi 0, %s27
      %s30 = sphi 0, %s28
      %s42 = sphi 0, %s44
      %s45 = sphi 0, %s42
      %s46 = sphi 0, %s45
      %s62 = sphi 0, %s46
      %s68 = sphi 0, %s70
      %s71 = sphi 0, %s68
      %s72 = sphi 0, %s71
      %s88 = sphi 0, %s72
      %s92 = sphi 0, %s92
      %s94 = sphi 0, %s92
      %s95 = sphi 0, %s94
      %s109 = sphi 0, %s95
      %s113 = sphi 0, %s113
      %s115 = sphi 0, %s113
      %s116 = sphi 0, %s115
      %s130 = sphi 0, %s116
      %s134 = sphi 0, %s134
      %s136 = sphi 0, %s134
      %s137 = sphi 0, %s136
      %s151 = sphi 0, %s137
      %s155 = sphi 0, %s155
      %s157 = sphi 0, %s155
      %s158 = sphi 0, %s157
      %s172 = sphi 0, %s158
      %s176 = sphi 0, %s176
      %s178 = sphi 0, %s176
      %s179 = sphi 0, %s178
      %s193 = sphi 0, %s179
      %s201 = sphi 0, %s203
      %s204 = sphi 0, %s201
      %s205 = sphi 0, %s204
      %s221 = sphi 0, %s205
      %s227 = sphi 0, %s229
      %s230 = sphi 0, %s227
      %s231 = sphi 0, %s230
      %s247 = sphi 0, %s231
    $region4: #{gru_sequence.1} parent=1 // loop_header_branch
      %21 = sbr.rel (%p19) target = $region8
    $region5: #{gru_sequence.1} parent=1 // loop_body
      %s23 = ssub.s32 %s18, 1
      %s24 = ssub.s32 %s18, 2
      %s31 = sadd.s32 1, %s26
      %p32 = scmp.ge.s32.totalorder %s31, 2
      %s33 = scalar_select %p32, 0, %s31
      %s34 = sadd.s32 1, %s25
      %s35 = scalar_select %p32, %s34, %s25
      %p36 = scmp.ge.s32.totalorder %s35, 2
      %s37 = scalar_select %p36, 0, %s35
      %s38 = ssub.s32 %s26, %s33
      %s39 = ssub.s32 %s25, %s37
      %s40 = sor.u32 %s38, %s39
      %p41 = scmp.eq.s32.totalorder %s40, 0
      %s43 = sadd.s32 %s42, 1
      %s44 = scalar_select %p41, %s42, %s43
      %p47 = pneg %p41
      %p48 = scmp.eq.s32.totalorder %s18, 3
      %p49 = por %p47, %p48
      %p50 = scmp.ne.s32.totalorder %s42, %s45
      %p51 = scmp.eq.s32.totalorder %s18, 0
      %p52 = por %p50, %p51
      %p53 = scmp.ne.s32.totalorder %s42, %s45
      %p54 = scmp.eq.s32.totalorder %s23, 3
      %p55 = por %p53, %p54
      %p56 = scmp.ne.s32.totalorder %s45, %s46
      %p57 = scmp.eq.s32.totalorder %s23, 0
      %p58 = por %p56, %p57
      %p59 = scmp.ne.s32.totalorder %s45, %s46
      %p60 = scmp.eq.s32.totalorder %s24, 3
      %p61 = por %p59, %p60
      %p63 = scmp.ne.s32.totalorder %s46, %s62
      %p64 = scmp.eq.s32.totalorder %s24, 0
      %p65 = por %p63, %p64
      %s66 = ssub.s32 %s25, %s37
      %p67 = scmp.eq.s32.totalorder %s66, 0
      %s69 = sadd.s32 %s68, 1
      %s70 = scalar_select %p67, %s68, %s69
      %p73 = pneg %p67
      %p74 = scmp.eq.s32.totalorder %s18, 3
      %p75 = por %p73, %p74
      %p76 = scmp.ne.s32.totalorder %s68, %s71
      %p77 = scmp.eq.s32.totalorder %s18, 0
      %p78 = por %p76, %p77
      %p79 = scmp.ne.s32.totalorder %s68, %s71
      %p80 = scmp.eq.s32.totalorder %s23, 3
      %p81 = por %p79, %p80
      %p82 = scmp.ne.s32.totalorder %s71, %s72
      %p83 = scmp.eq.s32.totalorder %s23, 0
      %p84 = por %p82, %p83
      %p85 = scmp.ne.s32.totalorder %s71, %s72
      %p86 = scmp.eq.s32.totalorder %s24, 3
      %p87 = por %p85, %p86
      %p89 = scmp.ne.s32.totalorder %s72, %s88
      %p90 = scmp.eq.s32.totalorder %s24, 0
      %p91 = por %p89, %p90
      %s93 = sadd.s32 %s92, 1
      %p96 = scmp.eq.s32.totalorder %s18, 3
      %p97 = scmp.ne.s32.totalorder %s92, %s94
      %p98 = scmp.eq.s32.totalorder %s18, 0
      %p99 = por %p97, %p98
      %p100 = scmp.ne.s32.totalorder %s92, %s94
      %p101 = scmp.eq.s32.totalorder %s23, 3
      %p102 = por %p100, %p101
      %p103 = scmp.ne.s32.totalorder %s94, %s95
      %p104 = scmp.eq.s32.totalorder %s23, 0
      %p105 = por %p103, %p104
      %p106 = scmp.ne.s32.totalorder %s94, %s95
      %p107 = scmp.eq.s32.totalorder %s24, 3
      %p108 = por %p106, %p107
      %p110 = scmp.ne.s32.totalorder %s95, %s109
      %p111 = scmp.eq.s32.totalorder %s24, 0
      %p112 = por %p110, %p111
      %s114 = sadd.s32 %s113, 1
      %p117 = scmp.eq.s32.totalorder %s18, 3
      %p118 = scmp.ne.s32.totalorder %s113, %s115
      %p119 = scmp.eq.s32.totalorder %s18, 0
      %p120 = por %p118, %p119
      %p121 = scmp.ne.s32.totalorder %s113, %s115
      %p122 = scmp.eq.s32.totalorder %s23, 3
      %p123 = por %p121, %p122
      %p124 = scmp.ne.s32.totalorder %s115, %s116
      %p125 = scmp.eq.s32.totalorder %s23, 0
      %p126 = por %p124, %p125
      %p127 = scmp.ne.s32.totalorder %s115, %s116
      %p128 = scmp.eq.s32.totalorder %s24, 3
      %p129 = por %p127, %p128
      %p131 = scmp.ne.s32.totalorder %s116, %s130
      %p132 = scmp.eq.s32.totalorder %s24, 0
      %p133 = por %p131, %p132
      %s135 = sadd.s32 %s134, 1
      %p138 = scmp.eq.s32.totalorder %s18, 3
      %p139 = scmp.ne.s32.totalorder %s134, %s136
      %p140 = scmp.eq.s32.totalorder %s18, 0
      %p141 = por %p139, %p140
      %p142 = scmp.ne.s32.totalorder %s134, %s136
      %p143 = scmp.eq.s32.totalorder %s23, 3
      %p144 = por %p142, %p143
      %p145 = scmp.ne.s32.totalorder %s136, %s137
      %p146 = scmp.eq.s32.totalorder %s23, 0
      %p147 = por %p145, %p146
      %p148 = scmp.ne.s32.totalorder %s136, %s137
      %p149 = scmp.eq.s32.totalorder %s24, 3
      %p150 = por %p148, %p149
      %p152 = scmp.ne.s32.totalorder %s137, %s151
      %p153 = scmp.eq.s32.totalorder %s24, 0
      %p154 = por %p152, %p153
      %s156 = sadd.s32 %s155, 1
      %p159 = scmp.eq.s32.totalorder %s18, 3
      %p160 = scmp.ne.s32.totalorder %s155, %s157
      %p161 = scmp.eq.s32.totalorder %s18, 0
      %p162 = por %p160, %p161
      %p163 = scmp.ne.s32.totalorder %s155, %s157
      %p164 = scmp.eq.s32.totalorder %s23, 3
      %p165 = por %p163, %p164
      %p166 = scmp.ne.s32.totalorder %s157, %s158
      %p167 = scmp.eq.s32.totalorder %s23, 0
      %p168 = por %p166, %p167
      %p169 = scmp.ne.s32.totalorder %s157, %s158
      %p170 = scmp.eq.s32.totalorder %s24, 3
      %p171 = por %p169, %p170
      %p173 = scmp.ne.s32.totalorder %s158, %s172
      %p174 = scmp.eq.s32.totalorder %s24, 0
      %p175 = por %p173, %p174
      %s177 = sadd.s32 %s176, 1
      %p180 = scmp.eq.s32.totalorder %s18, 3
      %p181 = scmp.ne.s32.totalorder %s176, %s178
      %p182 = scmp.eq.s32.totalorder %s18, 0
      %p183 = por %p181, %p182
      %p184 = scmp.ne.s32.totalorder %s176, %s178
      %p185 = scmp.eq.s32.totalorder %s23, 3
      %p186 = por %p184, %p185
      %p187 = scmp.ne.s32.totalorder %s178, %s179
      %p188 = scmp.eq.s32.totalorder %s23, 0
      %p189 = por %p187, %p188
      %p190 = scmp.ne.s32.totalorder %s178, %s179
      %p191 = scmp.eq.s32.totalorder %s24, 3
      %p192 = por %p190, %p191
      %p194 = scmp.ne.s32.totalorder %s179, %s193
      %p195 = scmp.eq.s32.totalorder %s24, 0
      %p196 = por %p194, %p195
      %s197 = ssub.s32 %s26, %s33
      %s198 = ssub.s32 %s25, %s37
      %s199 = sor.u32 %s197, %s198
      %p200 = scmp.eq.s32.totalorder %s199, 0
      %s202 = sadd.s32 %s201, 1
      %s203 = scalar_select %p200, %s201, %s202
      %p206 = pneg %p200
      %p207 = scmp.eq.s32.totalorder %s18, 3
      %p208 = por %p206, %p207
      %p209 = scmp.ne.s32.totalorder %s201, %s204
      %p210 = scmp.eq.s32.totalorder %s18, 0
      %p211 = por %p209, %p210
      %p212 = scmp.ne.s32.totalorder %s201, %s204
      %p213 = scmp.eq.s32.totalorder %s23, 3
      %p214 = por %p212, %p213
      %p215 = scmp.ne.s32.totalorder %s204, %s205
      %p216 = scmp.eq.s32.totalorder %s23, 0
      %p217 = por %p215, %p216
      %p218 = scmp.ne.s32.totalorder %s204, %s205
      %p219 = scmp.eq.s32.totalorder %s24, 3
      %p220 = por %p218, %p219
      %p222 = scmp.ne.s32.totalorder %s205, %s221
      %p223 = scmp.eq.s32.totalorder %s24, 0
      %p224 = por %p222, %p223
      %s225 = ssub.s32 %s25, %s37
      %p226 = scmp.eq.s32.totalorder %s225, 0
      %s228 = sadd.s32 %s227, 1
      %s229 = scalar_select %p226, %s227, %s228
      %p232 = pneg %p226
      %p233 = scmp.eq.s32.totalorder %s18, 3
      %p234 = por %p232, %p233
      %p235 = scmp.ne.s32.totalorder %s227, %s230
      %p236 = scmp.eq.s32.totalorder %s18, 0
      %p237 = por %p235, %p236
      %p238 = scmp.ne.s32.totalorder %s227, %s230
      %p239 = scmp.eq.s32.totalorder %s23, 3
      %p240 = por %p238, %p239
      %p241 = scmp.ne.s32.totalorder %s230, %s231
      %p242 = scmp.eq.s32.totalorder %s23, 0
      %p243 = por %p241, %p242
      %p244 = scmp.ne.s32.totalorder %s230, %s231
      %p245 = scmp.eq.s32.totalorder %s24, 3
      %p246 = por %p244, %p245
      %p248 = scmp.ne.s32.totalorder %s231, %s247
      %p249 = scmp.eq.s32.totalorder %s24, 0
      %p250 = por %p248, %p249
      %p251 = scmp.le.s32.totalorder 1, %s18
      %p252 = scmp.lt.s32.totalorder %s18, 5
      %p253 = pnand %p251, %p252
      %p254 = pneg %p253
      // Predicated region
      $region9: #{gru_sequence.1} parent=5 // pred_check
        _
      $region10: #{gru_sequence.1} parent=5 // pred_check_branch
        %256 = sbr.rel (%p253) target = $region12
      $region11: #{gru_sequence.1} parent=5 // pred_region
        %s257 = ssub.s32 %s18, 1
        // Predicated region
        $region13: #{gru_sequence.1} parent=11 // pred_check
          %p258 = pneg %p105
        $region14: #{gru_sequence.1} parent=11 // pred_check_branch
          %260 = sbr.rel (%p258) target = $region16
        $region15: #{gru_sequence.1} parent=11 // pred_region
          _
        $region16: #{gru_sequence.1} parent=11 // pred_fallthru
          _
        // Predicated region
        $region17: #{gru_sequence.1} parent=11 // pred_check
          %p261 = pneg %p126
        $region18: #{gru_sequence.1} parent=11 // pred_check_branch
          %263 = sbr.rel (%p261) target = $region20
        $region19: #{gru_sequence.1} parent=11 // pred_region
          _
        $region20: #{gru_sequence.1} parent=11 // pred_fallthru
          _
        // Predicated region
        $region21: #{gru_sequence.1} parent=11 // pred_check
          %p264 = pneg %p147
        $region22: #{gru_sequence.1} parent=11 // pred_check_branch
          %266 = sbr.rel (%p264) target = $region24
        $region23: #{gru_sequence.1} parent=11 // pred_region
          _
        $region24: #{gru_sequence.1} parent=11 // pred_fallthru
          _
        // Predicated region
        $region25: #{gru_sequence.1} parent=11 // pred_check
          %p267 = pneg %p168
        $region26: #{gru_sequence.1} parent=11 // pred_check_branch
          %269 = sbr.rel (%p267) target = $region28
        $region27: #{gru_sequence.1} parent=11 // pred_region
          _
        $region28: #{gru_sequence.1} parent=11 // pred_fallthru
          _
        // Predicated region
        $region29: #{gru_sequence.1} parent=11 // pred_check
          %p270 = pneg %p189
        $region30: #{gru_sequence.1} parent=11 // pred_check_branch
          %272 = sbr.rel (%p270) target = $region32
        $region31: #{gru_sequence.1} parent=11 // pred_region
          _
        $region32: #{gru_sequence.1} parent=11 // pred_fallthru
          _
      $region12: #{gru_sequence.1} parent=5 // pred_fallthru
        _
      %p273 = scmp.lt.s32.totalorder %s18, 4
      // Predicated region
      $region33: #{gru_sequence.1} parent=5 // pred_check
        %p274 = pneg %p273
      $region34: #{gru_sequence.1} parent=5 // pred_check_branch
        %276 = sbr.rel (%p274) target = $region36
      $region35: #{gru_sequence.1} parent=5 // pred_region
        // Predicated region
        $region37: #{gru_sequence.1} parent=35 // pred_check
          %p277 = pneg %p52
        $region38: #{gru_sequence.1} parent=35 // pred_check_branch
          %279 = sbr.rel (%p277) target = $region40
        $region39: #{gru_sequence.1} parent=35 // pred_region
          %s280 = sand.u32 %s42, 1
          %s281 = sand.u32 %s42, 1
          %s282 = smul.addr %s281, 128
          %s283 = scalar_lea.vmem [#allocation3], %s282
          %s284 = smul.u32 8, %s26
          %s285 = smul.u32 2, %s25
          %s286 = smul.addr %s284, 4
          %s287 = sadd.s32 %s285, %s286
          %s288 = smul.addr %s287, 8
          %s289 = scalar_lea.vmem %s0, %s288
          // Predicated region
          $region41: #{gru_sequence.1} parent=39 // pred_check
            _
          $region42: #{gru_sequence.1} parent=39 // pred_check_branch
            %291 = sbr.rel (0) target = $region44
          $region43: #{gru_sequence.1} parent=39 // pred_region
            // Predicated region
            $region45: #{gru_sequence.1} parent=43 // pred_check
              _
            $region46: #{gru_sequence.1} parent=43 // pred_check_branch
              %293 = sbr.rel (0) target = $region48
            $region47: #{gru_sequence.1} parent=43 // pred_region
              // Predicated region
              $region60: #{gru_sequence.1} parent=47 // pred_check
                _
              $region61: #{gru_sequence.1} parent=47 // pred_check_branch
                %338 = sbr.rel (0) target = $region63
              $region62: #{gru_sequence.1} parent=47 // pred_region
                loop: start=0, step=1, limit=1
                $region64: #{gru_sequence.1} parent=62 // loop_pre_header
                  _
                $region65: #{gru_sequence.1} parent=62 // loop_header
                  %s340 = sphi 0, %s344
                  %p341 = scmp.ge.s32.totalorder %s340, 1
                  %s345 = sphi %s289, %s289
                  %s346 = sphi %s283, %s283
                $region66: #{gru_sequence.1} parent=62 // loop_header_branch
                  %343 = sbr.rel (%p341) target = $region70
                $region67: #{gru_sequence.1} parent=62 // loop_body
                  %v347 = vld [vmem:[%s345] sm:$0xff]
                  %348 = vst [vmem:[%s346] sm:$0xff] %v347
                  %v349 = vld [vmem:[%s345 + $0x8] sm:$0xff]
                  %350 = vst [vmem:[%s346 + $0x8] sm:$0xff] %v349
                  %v351 = vld [vmem:[%s345 + $0x20] sm:$0xff]
                  %352 = vst [vmem:[%s346 + $0x10] sm:$0xff] %v351
                  %v353 = vld [vmem:[%s345 + $0x28] sm:$0xff]
                  %354 = vst [vmem:[%s346 + $0x18] sm:$0xff] %v353
                  %v355 = vld [vmem:[%s345 + $0x40] sm:$0xff]
                  %356 = vst [vmem:[%s346 + $0x20] sm:$0xff] %v355
                  %v357 = vld [vmem:[%s345 + $0x48] sm:$0xff]
                  %358 = vst [vmem:[%s346 + $0x28] sm:$0xff] %v357
                  %v359 = vld [vmem:[%s345 + $0x60] sm:$0xff]
                  %360 = vst [vmem:[%s346 + $0x30] sm:$0xff] %v359
                  %v361 = vld [vmem:[%s345 + $0x68] sm:$0xff]
                  %362 = vst [vmem:[%s346 + $0x38] sm:$0xff] %v361
                  %v363 = vld [vmem:[%s345 + $0x80] sm:$0xff]
                  %364 = vst [vmem:[%s346 + $0x40] sm:$0xff] %v363
                  %v365 = vld [vmem:[%s345 + $0x88] sm:$0xff]
                  %366 = vst [vmem:[%s346 + $0x48] sm:$0xff] %v365
                  %v367 = vld [vmem:[%s345 + $0xa0] sm:$0xff]
                  %368 = vst [vmem:[%s346 + $0x50] sm:$0xff] %v367
                  %v369 = vld [vmem:[%s345 + $0xa8] sm:$0xff]
                  %370 = vst [vmem:[%s346 + $0x58] sm:$0xff] %v369
                  %v371 = vld [vmem:[%s345 + $0xc0] sm:$0xff]
                  %372 = vst [vmem:[%s346 + $0x60] sm:$0xff] %v371
                  %v373 = vld [vmem:[%s345 + $0xc8] sm:$0xff]
                  %374 = vst [vmem:[%s346 + $0x68] sm:$0xff] %v373
                  %v375 = vld [vmem:[%s345 + $0xe0] sm:$0xff]
                  %376 = vst [vmem:[%s346 + $0x70] sm:$0xff] %v375
                  %v377 = vld [vmem:[%s345 + $0xe8] sm:$0xff]
                  %378 = vst [vmem:[%s346 + $0x78] sm:$0xff] %v377
                $region68: #{gru_sequence.1} parent=62 // loop_footer
                  %s344 = sadd.s32 1, %s340
                $region69: #{gru_sequence.1} parent=62 // loop_footer_branch
                  %339 = sbr.rel target = $region65
                $region70: #{gru_sequence.1} parent=62 // loop_exit
                  _
              $region63: #{gru_sequence.1} parent=47 // pred_fallthru
                _
              // Predicated region
              $region71: #{gru_sequence.1} parent=47 // pred_check
                _
              $region72: #{gru_sequence.1} parent=47 // pred_check_branch
                %380 = sbr.rel target = $region74
              $region73: #{gru_sequence.1} parent=47 // pred_region
                _
              $region74: #{gru_sequence.1} parent=47 // pred_fallthru
                _
            $region48: #{gru_sequence.1} parent=43 // pred_fallthru
              _
            // Predicated region
            $region49: #{gru_sequence.1} parent=43 // pred_check
              _
            $region50: #{gru_sequence.1} parent=43 // pred_check_branch
              %295 = sbr.rel target = $region52
            $region51: #{gru_sequence.1} parent=43 // pred_region
              loop: start=0, step=1, limit=1
              $region53: #{gru_sequence.1} parent=51 // loop_pre_header
                _
              $region54: #{gru_sequence.1} parent=51 // loop_header
                %s298 = sphi 0, %s302
                %p299 = scmp.ge.s32.totalorder %s298, 1
                %s303 = sphi %s289, %s289
                %s304 = sphi %s283, %s283
              $region55: #{gru_sequence.1} parent=51 // loop_header_branch
                %301 = sbr.rel (%p299) target = $region59
              $region56: #{gru_sequence.1} parent=51 // loop_body
                %v305 = vld [vmem:[%s303] sm:$0xff]
                %306 = vst [vmem:[%s304] sm:$0xff] %v305
                %v307 = vld [vmem:[%s303 + $0x8] sm:$0xff]
                %308 = vst [vmem:[%s304 + $0x8] sm:$0xff] %v307
                %v309 = vld [vmem:[%s303 + $0x20] sm:$0xff]
                %310 = vst [vmem:[%s304 + $0x10] sm:$0xff] %v309
                %v311 = vld [vmem:[%s303 + $0x28] sm:$0xff]
                %312 = vst [vmem:[%s304 + $0x18] sm:$0xff] %v311
                %v313 = vld [vmem:[%s303 + $0x40] sm:$0xff]
                %314 = vst [vmem:[%s304 + $0x20] sm:$0xff] %v313
                %v315 = vld [vmem:[%s303 + $0x48] sm:$0xff]
                %316 = vst [vmem:[%s304 + $0x28] sm:$0xff] %v315
                %v317 = vld [vmem:[%s303 + $0x60] sm:$0xff]
                %318 = vst [vmem:[%s304 + $0x30] sm:$0xff] %v317
                %v319 = vld [vmem:[%s303 + $0x68] sm:$0xff]
                %320 = vst [vmem:[%s304 + $0x38] sm:$0xff] %v319
                %v321 = vld [vmem:[%s303 + $0x80] sm:$0xff]
                %322 = vst [vmem:[%s304 + $0x40] sm:$0xff] %v321
                %v323 = vld [vmem:[%s303 + $0x88] sm:$0xff]
                %324 = vst [vmem:[%s304 + $0x48] sm:$0xff] %v323
                %v325 = vld [vmem:[%s303 + $0xa0] sm:$0xff]
                %326 = vst [vmem:[%s304 + $0x50] sm:$0xff] %v325
                %v327 = vld [vmem:[%s303 + $0xa8] sm:$0xff]
                %328 = vst [vmem:[%s304 + $0x58] sm:$0xff] %v327
                %v329 = vld [vmem:[%s303 + $0xc0] sm:$0xff]
                %330 = vst [vmem:[%s304 + $0x60] sm:$0xff] %v329
                %v331 = vld [vmem:[%s303 + $0xc8] sm:$0xff]
                %332 = vst [vmem:[%s304 + $0x68] sm:$0xff] %v331
                %v333 = vld [vmem:[%s303 + $0xe0] sm:$0xff]
                %334 = vst [vmem:[%s304 + $0x70] sm:$0xff] %v333
                %v335 = vld [vmem:[%s303 + $0xe8] sm:$0xff]
                %336 = vst [vmem:[%s304 + $0x78] sm:$0xff] %v335
              $region57: #{gru_sequence.1} parent=51 // loop_footer
                %s302 = sadd.s32 1, %s298
              $region58: #{gru_sequence.1} parent=51 // loop_footer_branch
                %297 = sbr.rel target = $region54
              $region59: #{gru_sequence.1} parent=51 // loop_exit
                _
            $region52: #{gru_sequence.1} parent=43 // pred_fallthru
              _
          $region44: #{gru_sequence.1} parent=39 // pred_fallthru
            _
          %381 = vnop
        $region40: #{gru_sequence.1} parent=35 // pred_fallthru
          _
        // Predicated region
        $region75: #{gru_sequence.1} parent=35 // pred_check
          %p382 = pneg %p78
        $region76: #{gru_sequence.1} parent=35 // pred_check_branch
          %384 = sbr.rel (%p382) target = $region78
        $region77: #{gru_sequence.1} parent=35 // pred_region
          %s385 = smul.u32 2, %s25
          %p386 = scmp.lt.s32.totalorder %s385, 3
          %s387 = scalar_select %p386, %s385, 3
          %s388 = smul.addr %s387, 8
          %s389 = scalar_lea.vmem %s1, %s388
          %s390 = smul.u32 2, %s25
        $region78: #{gru_sequence.1} parent=35 // pred_fallthru
          _
      $region36: #{gru_sequence.1} parent=5 // pred_fallthru
        _
      %p391 = scmp.le.s32.totalorder 1, %s18
      %p392 = scmp.lt.s32.totalorder %s18, 5
      %p393 = pnand %p391, %p392
      %p394 = pneg %p393
      // Predicated region
      $region79: #{gru_sequence.1} parent=5 // pred_check
        _
      $region80: #{gru_sequence.1} parent=5 // pred_check_branch
        %396 = sbr.rel (%p393) target = $region82
      $region81: #{gru_sequence.1} parent=5 // pred_region
        %s397 = ssub.s32 %s18, 1
        %s398 = sand.u32 %s45, 1
        %s399 = sand.u32 %s45, 1
        %s400 = smul.addr %s399, 128
        %s401 = scalar_lea.vmem [#allocation3], %s400
        // Predicated region
        $region83: #{gru_sequence.1} parent=81 // pred_check
          %p402 = pneg %p58
        $region84: #{gru_sequence.1} parent=81 // pred_check_branch
          %404 = sbr.rel (%p402) target = $region86
        $region85: #{gru_sequence.1} parent=81 // pred_region
          _
        $region86: #{gru_sequence.1} parent=81 // pred_fallthru
          _
        %s405 = sand.u32 %s45, 1
        %s406 = sand.u32 %s45, 1
        %s407 = smul.addr %s406, 128
        %s408 = scalar_lea.vmem [#allocation3], %s407
        %p409 = pneg %p58
        %p410 = pneg %p55
        %s411 = smul.u32 2, %s27
        %p412 = scmp.lt.s32.totalorder %s411, 3
        %s413 = scalar_select %p412, %s411, 3
        %s414 = smul.addr %s413, 8
        %s415 = scalar_lea.vmem %s1, %s414
        %p416 = pneg %p84
        %p417 = pneg %p81
        %p418 = pneg %p105
        %p419 = pneg %p102
        %p420 = pneg %p126
        %p421 = pneg %p123
        %p422 = pneg %p147
        %p423 = pneg %p144
        %p424 = pneg %p168
        %p425 = pneg %p165
        %p426 = pneg %p189
        %p427 = pneg %p186
        %p428 = pneg %p217
        %p429 = pneg %p214
        %s430 = sand.u32 %s204, 1
        %s431 = sand.u32 %s204, 1
        %s432 = smul.addr %s431, 128
        %s433 = scalar_lea.vmem [#allocation4], %s432
        %p434 = pneg %p243
        %p435 = pneg %p240
        %s436 = sand.u32 %s230, 1
        %s437 = scalar_lea.sflag [#allocation6], %s436
        %s438 = sand.u32 %s230, 1
        %s439 = smul.addr %s438, 16
        %s440 = scalar_lea.vmem [#allocation5], %s439
        %s441 = smul.u32 8, %s28
        %s442 = smul.u32 2, %s27
        %s443 = smul.u32 2, %s27
        %p444 = scmp.lt.s32.totalorder %s443, 3
        %s445 = scalar_select %p444, %s443, 3
        %s446 = smul.addr %s445, 8
        %s447 = scalar_lea.vmem %s1, %s446
        %s448 = smul.u32 2, %s27
        %s449 = smul.u32 8, %s28
        %s450 = smul.u32 2, %s27
        %s451 = smul.u32 2, %s27
        %p452 = scmp.eq.s32.totalorder %s28, 0
        // Predicated region
        $region87: #{gru_sequence.1} parent=81 // pred_check
          %p453 = pneg %p452
        $region88: #{gru_sequence.1} parent=81 // pred_check_branch
          %455 = sbr.rel (%p453) target = $region90
        $region89: #{gru_sequence.1} parent=81 // pred_region
          %v456 = vld [vmem:[%s447] sm:$0xff]
          %v457 = vld [vmem:[%s447 + $0x8] sm:$0xff]
          %458 = vst [vmem:[%s440] sm:$0xff] %v456
          %459 = vst [vmem:[%s440 + $0x8] sm:$0xff] %v457
        $region90: #{gru_sequence.1} parent=81 // pred_fallthru
          _
        %v460 = vld [vmem:[%s401] sm:$0xff]
        %v461 = vld [vmem:[%s401 + $0x8] sm:$0xff]
        %v462 = vld [vmem:[%s401 + $0x10] sm:$0xff]
        %v463 = vld [vmem:[%s401 + $0x18] sm:$0xff]
        %v464 = vld [vmem:[%s401 + $0x20] sm:$0xff]
        %v465 = vld [vmem:[%s401 + $0x28] sm:$0xff]
        %v466 = vld [vmem:[%s401 + $0x30] sm:$0xff]
        %v467 = vld [vmem:[%s401 + $0x38] sm:$0xff]
        %v468 = vld [vmem:[%s401 + $0x40] sm:$0xff]
        %v469 = vld [vmem:[%s401 + $0x48] sm:$0xff]
        %v470 = vld [vmem:[%s401 + $0x50] sm:$0xff]
        %v471 = vld [vmem:[%s401 + $0x58] sm:$0xff]
        %v472 = vld [vmem:[%s401 + $0x60] sm:$0xff]
        %v473 = vld [vmem:[%s401 + $0x68] sm:$0xff]
        %v474 = vld [vmem:[%s401 + $0x70] sm:$0xff]
        %v475 = vld [vmem:[%s401 + $0x78] sm:$0xff]
        %v476 = vld [vmem:[%s2] sm:$0xff]
        %v477 = vld [vmem:[%s4] sm:$0x1]
        %v479 = vlaneseq
        %v480 = vshrl.u32 %v479, 7
        %v481 = vsub.s32 0, %v480
        %v482 = vrot.slane %v477, %v481
        %vm484 = vcmask 64512
        %v486 = vsel %vm484, %v460, 0
        %v489 = vsel %vm484, %v461, 0
        %v492 = vsel %vm484, %v462, 0
        %v495 = vsel %vm484, %v463, 0
        %v498 = vsel %vm484, %v464, 0
        %v501 = vsel %vm484, %v465, 0
        %v504 = vsel %vm484, %v466, 0
        %v507 = vsel %vm484, %v467, 0
        %v510 = vsel %vm484, %v468, 0
        %v513 = vsel %vm484, %v469, 0
        %v516 = vsel %vm484, %v470, 0
        %v519 = vsel %vm484, %v471, 0
        %v522 = vsel %vm484, %v472, 0
        %v525 = vsel %vm484, %v473, 0
        %v528 = vsel %vm484, %v474, 0
        %v531 = vsel %vm484, %v475, 0
        %533 = vmatprep.subr.mxu0 0.0
        %534 = vmatpush1.msra.mxu0 %v476
        %535 = vmatprep.subr.mxu0 0.0
        %536 = vmatpush1.msra.mxu0 0.0
        %537 = vmatprep.subr.mxu0 0.0
        %538 = vmatpush1.msra.mxu0 0.0
        %539 = vmatprep.subr.mxu0 0.0
        %540 = vmatpush1.msra.mxu0 0.0
        %541 = vmatprep.subr.mxu0 0.0
        %542 = vmatpush1.msra.mxu0 0.0
        %543 = vmatprep.subr.mxu0 0.0
        %544 = vmatpush1.msra.mxu0 0.0
        %545 = vmatprep.subr.mxu0 0.0
        %546 = vmatpush1.msra.mxu0 0.0
        %547 = vmatprep.subr.mxu0 0.0
        %548 = vmatpush1.msra.mxu0 0.0
        %549 = vmatprep.subr.mxu0 0.0
        %550 = vmatpush1.msra.mxu0 0.0
        %551 = vmatprep.subr.mxu0 0.0
        %552 = vmatpush1.msra.mxu0 0.0
        %553 = vmatprep.subr.mxu0 0.0
        %554 = vmatpush1.msra.mxu0 0.0
        %555 = vmatprep.subr.mxu0 0.0
        %556 = vmatpush1.msra.mxu0 0.0
        %557 = vmatprep.subr.mxu0 0.0
        %558 = vmatpush1.msra.mxu0 0.0
        %559 = vmatprep.subr.mxu0 0.0
        %560 = vmatpush1.msra.mxu0 0.0
        %561 = vmatprep.subr.mxu0 0.0
        %562 = vmatpush1.msra.mxu0 0.0
        %563 = vmatprep.subr.mxu0 0.0
        %564 = vmatpush1.msra.mxu0 0.0
        %565 = vmatprep.subr.mxu0 0.0
        %566 = vmatpush1.msra.mxu0 0.0
        %567 = vmatprep.subr.mxu0 0.0
        %568 = vmatpush1.msra.mxu0 0.0
        %569 = vmatprep.subr.mxu0 0.0
        %570 = vmatpush1.msra.mxu0 0.0
        %571 = vmatprep.subr.mxu0 0.0
        %572 = vmatpush1.msra.mxu0 0.0
        %573 = vmatprep.subr.mxu0 0.0
        %574 = vmatpush1.msra.mxu0 0.0
        %575 = vmatprep.subr.mxu0 0.0
        %576 = vmatpush1.msra.mxu0 0.0
        %577 = vmatprep.subr.mxu0 0.0
        %578 = vmatpush1.msra.mxu0 0.0
        %579 = vmatprep.subr.mxu0 0.0
        %580 = vmatpush1.msra.mxu0 0.0
        %581 = vmatprep.subr.mxu0 0.0
        %582 = vmatpush1.msra.mxu0 0.0
        %583 = vmatprep.subr.mxu0 0.0
        %584 = vmatpush1.msra.mxu0 0.0
        %585 = vmatprep.subr.mxu0 0.0
        %586 = vmatpush1.msra.mxu0 0.0
        %587 = vmatprep.subr.mxu0 0.0
        %588 = vmatpush1.msra.mxu0 0.0
        %589 = vmatprep.subr.mxu0 0.0
        %590 = vmatpush1.msra.mxu0 0.0
        %591 = vmatprep.subr.mxu0 0.0
        %592 = vmatpush1.msra.mxu0 0.0
        %593 = vmatprep.subr.mxu0 0.0
        %594 = vmatpush1.msra.mxu0 0.0
        %595 = vmatprep.subr.mxu0 0.0
        %596 = vmatpush1.msra.mxu0 0.0
        %597 = vmatprep.mubr.f32.mxu0 0.0
        %598 = vmatmul.mubr.f32.gmra.mrb[0].mxu0 %v486
        %v599 = vpop.f32.mrb[0].mxu0
        %v600 = vadd.f32 %v482, %v599
        %v601 = vpop.f32.mrb[0].mxu0
        %602 = vmatprep.mubr.f32.mxu0 0.0
        %603 = vmatmul.mubr.f32.gmra.mrb[0].mxu0 %v489
        %v604 = vpop.f32.mrb[0].mxu0
        %v605 = vadd.f32 %v482, %v604
        %v606 = vpop.f32.mrb[0].mxu0
        %607 = vmatprep.mubr.f32.mxu0 0.0
        %608 = vmatmul.mubr.f32.gmra.mrb[0].mxu0 %v492
        %v609 = vpop.f32.mrb[0].mxu0
        %v610 = vadd.f32 %v482, %v609
        %v611 = vpop.f32.mrb[0].mxu0
        %612 = vmatprep.mubr.f32.mxu0 0.0
        %613 = vmatmul.mubr.f32.gmra.mrb[0].mxu0 %v495
        %v614 = vpop.f32.mrb[0].mxu0
        %v615 = vadd.f32 %v482, %v614
        %v616 = vpop.f32.mrb[0].mxu0
        %617 = vmatprep.mubr.f32.mxu0 0.0
        %618 = vmatmul.mubr.f32.gmra.mrb[0].mxu0 %v498
        %v619 = vpop.f32.mrb[0].mxu0
        %v620 = vadd.f32 %v482, %v619
        %v621 = vpop.f32.mrb[0].mxu0
        %622 = vmatprep.mubr.f32.mxu0 0.0
        %623 = vmatmul.mubr.f32.gmra.mrb[0].mxu0 %v501
        %v624 = vpop.f32.mrb[0].mxu0
        %v625 = vadd.f32 %v482, %v624
        %v626 = vpop.f32.mrb[0].mxu0
        %627 = vmatprep.mubr.f32.mxu0 0.0
        %628 = vmatmul.mubr.f32.gmra.mrb[0].mxu0 %v504
        %v629 = vpop.f32.mrb[0].mxu0
        %v630 = vadd.f32 %v482, %v629
        %v631 = vpop.f32.mrb[0].mxu0
        %632 = vmatprep.mubr.f32.mxu0 0.0
        %633 = vmatmul.mubr.f32.gmra.mrb[0].mxu0 %v507
        %v634 = vpop.f32.mrb[0].mxu0
        %v635 = vadd.f32 %v482, %v634
        %v636 = vpop.f32.mrb[0].mxu0
        %637 = vmatprep.mubr.f32.mxu0 0.0
        %638 = vmatmul.mubr.f32.gmra.mrb[0].mxu0 %v510
        %v639 = vpop.f32.mrb[0].mxu0
        %v640 = vadd.f32 %v482, %v639
        %v641 = vpop.f32.mrb[0].mxu0
        %642 = vmatprep.mubr.f32.mxu0 0.0
        %643 = vmatmul.mubr.f32.gmra.mrb[0].mxu0 %v513
        %v644 = vpop.f32.mrb[0].mxu0
        %v645 = vadd.f32 %v482, %v644
        %v646 = vpop.f32.mrb[0].mxu0
        %647 = vmatprep.mubr.f32.mxu0 0.0
        %648 = vmatmul.mubr.f32.gmra.mrb[0].mxu0 %v516
        %v649 = vpop.f32.mrb[0].mxu0
        %v650 = vadd.f32 %v482, %v649
        %v651 = vpop.f32.mrb[0].mxu0
        %652 = vmatprep.mubr.f32.mxu0 0.0
        %653 = vmatmul.mubr.f32.gmra.mrb[0].mxu0 %v519
        %v654 = vpop.f32.mrb[0].mxu0
        %v655 = vadd.f32 %v482, %v654
        %v656 = vpop.f32.mrb[0].mxu0
        %657 = vmatprep.mubr.f32.mxu0 0.0
        %658 = vmatmul.mubr.f32.gmra.mrb[0].mxu0 %v522
        %v659 = vpop.f32.mrb[0].mxu0
        %v660 = vadd.f32 %v482, %v659
        %v661 = vpop.f32.mrb[0].mxu0
        %662 = vmatprep.mubr.f32.mxu0 0.0
        %663 = vmatmul.mubr.f32.gmra.mrb[0].mxu0 %v525
        %v664 = vpop.f32.mrb[0].mxu0
        %v665 = vadd.f32 %v482, %v664
        %v666 = vpop.f32.mrb[0].mxu0
        %667 = vmatprep.mubr.f32.mxu0 0.0
        %668 = vmatmul.mubr.f32.gmra.mrb[0].mxu0 %v528
        %v669 = vpop.f32.mrb[0].mxu0
        %v670 = vadd.f32 %v482, %v669
        %v671 = vpop.f32.mrb[0].mxu0
        %672 = vmatprep.mubr.f32.mxu0 0.0
        %673 = vmatmul.mubr.f32.gmra.mrb[0].mxu0 %v531
        %v674 = vpop.f32.mrb[0].mxu0
        %v675 = vadd.f32 %v482, %v674
        %v676 = vpop.f32.mrb[0].mxu0
        %677 = vdwg.mxu0
        %678 = vst [vmem:[#allocation2] sm:$0xff] %v600
        %679 = vst [vmem:[#allocation2 + $0x8] sm:$0xff] %v605
        %680 = vst [vmem:[#allocation2 + $0x10] sm:$0xff] %v610
        %681 = vst [vmem:[#allocation2 + $0x18] sm:$0xff] %v615
        %682 = vst [vmem:[#allocation2 + $0x20] sm:$0xff] %v620
        %683 = vst [vmem:[#allocation2 + $0x28] sm:$0xff] %v625
        %684 = vst [vmem:[#allocation2 + $0x30] sm:$0xff] %v630
        %685 = vst [vmem:[#allocation2 + $0x38] sm:$0xff] %v635
        %686 = vst [vmem:[#allocation2 + $0x40] sm:$0xff] %v640
        %687 = vst [vmem:[#allocation2 + $0x48] sm:$0xff] %v645
        %688 = vst [vmem:[#allocation2 + $0x50] sm:$0xff] %v650
        %689 = vst [vmem:[#allocation2 + $0x58] sm:$0xff] %v655
        %690 = vst [vmem:[#allocation2 + $0x60] sm:$0xff] %v660
        %691 = vst [vmem:[#allocation2 + $0x68] sm:$0xff] %v665
        %692 = vst [vmem:[#allocation2 + $0x70] sm:$0xff] %v670
        %693 = vst [vmem:[#allocation2 + $0x78] sm:$0xff] %v675
        %v694 = vld [vmem:[%s3] sm:$0xff]
        %v695 = vld [vmem:[%s3 + $0x8] sm:$0xff]
        %v696 = vld [vmem:[%s3 + $0x10] sm:$0xff]
        %v697 = vld [vmem:[%s3 + $0x18] sm:$0xff]
        %v698 = vld [vmem:[%s3 + $0x20] sm:$0xff]
        %v699 = vld [vmem:[%s3 + $0x28] sm:$0xff]
        %v700 = vld [vmem:[%s3 + $0x30] sm:$0xff]
        %v701 = vld [vmem:[%s3 + $0x38] sm:$0xff]
        %v702 = vld [vmem:[%s3 + $0x40] sm:$0xff]
        %v703 = vld [vmem:[%s3 + $0x48] sm:$0xff]
        %v704 = vld [vmem:[%s3 + $0x50] sm:$0xff]
        %v705 = vld [vmem:[%s3 + $0x58] sm:$0xff]
        %v706 = vld [vmem:[%s3 + $0x60] sm:$0xff]
        %v707 = vld [vmem:[%s3 + $0x68] sm:$0xff]
        %v708 = vld [vmem:[%s3 + $0x70] sm:$0xff]
        %v709 = vld [vmem:[%s3 + $0x78] sm:$0xff]
        %v710 = vld [vmem:[%s440] sm:$0xff]
        %v711 = vld [vmem:[%s440 + $0x8] sm:$0xff]
        %v712 = vld [vmem:[#allocation2] sm:$0xff]
        %v713 = vld [vmem:[#allocation2 + $0x8] sm:$0xff]
        %714 = vmatprep.subr.mxu0 0.0
        %715 = vmatpush1.msra.mxu0 %v694
        %716 = vmatprep.subr.mxu0 0.0
        %717 = vmatpush1.msra.mxu0 %v695
        %718 = vmatprep.subr.mxu0 0.0
        %719 = vmatpush1.msra.mxu0 %v696
        %720 = vmatprep.subr.mxu0 0.0
        %721 = vmatpush1.msra.mxu0 %v697
        %722 = vmatprep.subr.mxu0 0.0
        %723 = vmatpush1.msra.mxu0 %v698
        %724 = vmatprep.subr.mxu0 0.0
        %725 = vmatpush1.msra.mxu0 %v699
        %726 = vmatprep.subr.mxu0 0.0
        %727 = vmatpush1.msra.mxu0 %v700
        %728 = vmatprep.subr.mxu0 0.0
        %729 = vmatpush1.msra.mxu0 %v701
        %730 = vmatprep.subr.mxu0 0.0
        %731 = vmatpush1.msra.mxu0 %v702
        %732 = vmatprep.subr.mxu0 0.0
        %733 = vmatpush1.msra.mxu0 %v703
        %734 = vmatprep.subr.mxu0 0.0
        %735 = vmatpush1.msra.mxu0 %v704
        %736 = vmatprep.subr.mxu0 0.0
        %737 = vmatpush1.msra.mxu0 %v705
        %738 = vmatprep.subr.mxu0 0.0
        %739 = vmatpush1.msra.mxu0 %v706
        %740 = vmatprep.subr.mxu0 0.0
        %741 = vmatpush1.msra.mxu0 %v707
        %742 = vmatprep.subr.mxu0 0.0
        %743 = vmatpush1.msra.mxu0 %v708
        %744 = vmatprep.subr.mxu0 0.0
        %745 = vmatpush1.msra.mxu0 %v709
        %746 = vmatprep.subr.mxu0 0.0
        %747 = vmatpush1.msra.mxu0 0.0
        %748 = vmatprep.subr.mxu0 0.0
        %749 = vmatpush1.msra.mxu0 0.0
        %750 = vmatprep.subr.mxu0 0.0
        %751 = vmatpush1.msra.mxu0 0.0
        %752 = vmatprep.subr.mxu0 0.0
        %753 = vmatpush1.msra.mxu0 0.0
        %754 = vmatprep.subr.mxu0 0.0
        %755 = vmatpush1.msra.mxu0 0.0
        %756 = vmatprep.subr.mxu0 0.0
        %757 = vmatpush1.msra.mxu0 0.0
        %758 = vmatprep.subr.mxu0 0.0
        %759 = vmatpush1.msra.mxu0 0.0
        %760 = vmatprep.subr.mxu0 0.0
        %761 = vmatpush1.msra.mxu0 0.0
        %762 = vmatprep.subr.mxu0 0.0
        %763 = vmatpush1.msra.mxu0 0.0
        %764 = vmatprep.subr.mxu0 0.0
        %765 = vmatpush1.msra.mxu0 0.0
        %766 = vmatprep.subr.mxu0 0.0
        %767 = vmatpush1.msra.mxu0 0.0
        %768 = vmatprep.subr.mxu0 0.0
        %769 = vmatpush1.msra.mxu0 0.0
        %770 = vmatprep.subr.mxu0 0.0
        %771 = vmatpush1.msra.mxu0 0.0
        %772 = vmatprep.subr.mxu0 0.0
        %773 = vmatpush1.msra.mxu0 0.0
        %774 = vmatprep.subr.mxu0 0.0
        %775 = vmatpush1.msra.mxu0 0.0
        %776 = vmatprep.subr.mxu0 0.0
        %777 = vmatpush1.msra.mxu0 0.0
        %778 = vmatprep.mubr.f32.mxu0 0.0
        %779 = vmatmul.mubr.f32.gmra.mrb[0].mxu0 %v710
        %v780 = vpop.f32.mrb[0].mxu0
        %v781 = vadd.f32 0.0, %v780
        %v782 = vpop.f32.mrb[0].mxu0
        %783 = vmatprep.mubr.f32.mxu0 0.0
        %784 = vmatmul.mubr.f32.gmra.mrb[0].mxu0 %v711
        %v785 = vpop.f32.mrb[0].mxu0
        %v786 = vadd.f32 0.0, %v785
        %v787 = vpop.f32.mrb[0].mxu0
        %788 = vdwg.mxu0
        %v789 = vadd.f32 %v712, %v781
        %v790 = vadd.f32 %v713, %v786
        %v791 = vand.u32 2147483647, %v789
        %v792 = vand.u32 2147483647, %v790
        %v793 = vsub.f32 0.0, %v791
        %v794 = vsub.f32 0.0, %v792
        %v795 = vmul.f32 %v793, 1.442695
        %v796 = vpow.pop %v795
        %v797 = vmul.f32 %v794, 1.442695
        %v798 = vpow.pop %v797
        %v799 = vmul.f32 %v796, %v796
        %v800 = vmul.f32 %v798, %v798
        %v801 = vadd.f32 %v796, 1.0
        %v802 = vadd.f32 %v798, 1.0
        %v803 = vrcp.pop %v801
        %v804 = vmul.f32 1.0, %v803
        %v805 = vrcp.pop %v802
        %v806 = vmul.f32 1.0, %v805
        %v807 = vsub.f32 1.0, %v799
        %v808 = vsub.f32 1.0, %v800
        %v809 = vadd.f32 %v799, 1.0
        %v810 = vadd.f32 %v800, 1.0
        %v811 = vrcp.pop %v809
        %v812 = vmul.f32 %v807, %v811
        %v813 = vrcp.pop %v810
        %v814 = vmul.f32 %v808, %v813
        %vm815 = vcmp.ge.f32.partialorder %v789, 0.0
        %vm816 = vcmp.ge.f32.partialorder %v790, 0.0
        %v817 = vsub.f32 1.0, %v804
        %v818 = vsub.f32 1.0, %v806
        %v819 = vsel %vm815, %v804, %v817
        %v820 = vsel %vm816, %v806, %v818
        %v821 = vsub.f32 0.0, %v812
        %v822 = vsub.f32 0.0, %v814
        %v823 = vsel %vm815, %v812, %v821
        %v824 = vsel %vm816, %v814, %v822
        %v825 = vmul.f32 %v819, %v710
        %v826 = vmul.f32 %v820, %v711
        %v827 = vsub.f32 1.0, %v819
        %v828 = vsub.f32 1.0, %v820
        %v829 = vmul.f32 %v827, %v823
        %v830 = vmul.f32 %v828, %v824
        %v831 = vadd.f32 %v825, %v829
        %v832 = vadd.f32 %v826, %v830
        %833 = vst [vmem:[#allocation2] sm:$0xff] %v831
        %834 = vst [vmem:[#allocation2 + $0x8] sm:$0xff] %v832
        %s835 = scalar_lea.vmem [#allocation2], 16
        %v836 = vld [vmem:[%s835] sm:$0xff]
        %v837 = vld [vmem:[%s835 + $0x8] sm:$0xff]
        %838 = vmatprep.subr.mxu0 0.0
        %839 = vmatpush1.msra.mxu0 %v694
        %840 = vmatprep.subr.mxu0 0.0
        %841 = vmatpush1.msra.mxu0 %v695
        %842 = vmatprep.subr.mxu0 0.0
        %843 = vmatpush1.msra.mxu0 %v696
        %844 = vmatprep.subr.mxu0 0.0
        %845 = vmatpush1.msra.mxu0 %v697
        %846 = vmatprep.subr.mxu0 0.0
        %847 = vmatpush1.msra.mxu0 %v698
        %848 = vmatprep.subr.mxu0 0.0
        %849 = vmatpush1.msra.mxu0 %v699
        %850 = vmatprep.subr.mxu0 0.0
        %851 = vmatpush1.msra.mxu0 %v700
        %852 = vmatprep.subr.mxu0 0.0
        %853 = vmatpush1.msra.mxu0 %v701
        %854 = vmatprep.subr.mxu0 0.0
        %855 = vmatpush1.msra.mxu0 %v702
        %856 = vmatprep.subr.mxu0 0.0
        %857 = vmatpush1.msra.mxu0 %v703
        %858 = vmatprep.subr.mxu0 0.0
        %859 = vmatpush1.msra.mxu0 %v704
        %860 = vmatprep.subr.mxu0 0.0
        %861 = vmatpush1.msra.mxu0 %v705
        %862 = vmatprep.subr.mxu0 0.0
        %863 = vmatpush1.msra.mxu0 %v706
        %864 = vmatprep.subr.mxu0 0.0
        %865 = vmatpush1.msra.mxu0 %v707
        %866 = vmatprep.subr.mxu0 0.0
        %867 = vmatpush1.msra.mxu0 %v708
        %868 = vmatprep.subr.mxu0 0.0
        %869 = vmatpush1.msra.mxu0 %v709
        %870 = vmatprep.subr.mxu0 0.0
        %871 = vmatpush1.msra.mxu0 0.0
        %872 = vmatprep.subr.mxu0 0.0
        %873 = vmatpush1.msra.mxu0 0.0
        %874 = vmatprep.subr.mxu0 0.0
        %875 = vmatpush1.msra.mxu0 0.0
        %876 = vmatprep.subr.mxu0 0.0
        %877 = vmatpush1.msra.mxu0 0.0
        %878 = vmatprep.subr.mxu0 0.0
        %879 = vmatpush1.msra.mxu0 0.0
        %880 = vmatprep.subr.mxu0 0.0
        %881 = vmatpush1.msra.mxu0 0.0
        %882 = vmatprep.subr.mxu0 0.0
        %883 = vmatpush1.msra.mxu0 0.0
        %884 = vmatprep.subr.mxu0 0.0
        %885 = vmatpush1.msra.mxu0 0.0
        %886 = vmatprep.subr.mxu0 0.0
        %887 = vmatpush1.msra.mxu0 0.0
        %888 = vmatprep.subr.mxu0 0.0
        %889 = vmatpush1.msra.mxu0 0.0
        %890 = vmatprep.subr.mxu0 0.0
        %891 = vmatpush1.msra.mxu0 0.0
        %892 = vmatprep.subr.mxu0 0.0
        %893 = vmatpush1.msra.mxu0 0.0
        %894 = vmatprep.subr.mxu0 0.0
        %895 = vmatpush1.msra.mxu0 0.0
        %896 = vmatprep.subr.mxu0 0.0
        %897 = vmatpush1.msra.mxu0 0.0
        %898 = vmatprep.subr.mxu0 0.0
        %899 = vmatpush1.msra.mxu0 0.0
        %900 = vmatprep.subr.mxu0 0.0
        %901 = vmatpush1.msra.mxu0 0.0
        %902 = vmatprep.mubr.f32.mxu0 0.0
        %903 = vmatmul.mubr.f32.gmra.mrb[0].mxu0 %v831
        %v904 = vpop.f32.mrb[0].mxu0
        %v905 = vadd.f32 0.0, %v904
        %v906 = vpop.f32.mrb[0].mxu0
        %907 = vmatprep.mubr.f32.mxu0 0.0
        %908 = vmatmul.mubr.f32.gmra.mrb[0].mxu0 %v832
        %v909 = vpop.f32.mrb[0].mxu0
        %v910 = vadd.f32 0.0, %v909
        %v911 = vpop.f32.mrb[0].mxu0
        %912 = vdwg.mxu0
        %v913 = vadd.f32 %v836, %v905
        %v914 = vadd.f32 %v837, %v910
        %v915 = vand.u32 2147483647, %v913
        %v916 = vand.u32 2147483647, %v914
        %v917 = vsub.f32 0.0, %v915
        %v918 = vsub.f32 0.0, %v916
        %v919 = vmul.f32 %v917, 1.442695
        %v920 = vpow.pop %v919
        %v921 = vmul.f32 %v918, 1.442695
        %v922 = vpow.pop %v921
        %v923 = vmul.f32 %v920, %v920
        %v924 = vmul.f32 %v922, %v922
        %v925 = vadd.f32 %v920, 1.0
        %v926 = vadd.f32 %v922, 1.0
        %v927 = vrcp.pop %v925
        %v928 = vmul.f32 1.0, %v927
        %v929 = vrcp.pop %v926
        %v930 = vmul.f32 1.0, %v929
        %v931 = vsub.f32 1.0, %v923
        %v932 = vsub.f32 1.0, %v924
        %v933 = vadd.f32 %v923, 1.0
        %v934 = vadd.f32 %v924, 1.0
        %v935 = vrcp.pop %v933
        %v936 = vmul.f32 %v931, %v935
        %v937 = vrcp.pop %v934
        %v938 = vmul.f32 %v932, %v937
        %vm939 = vcmp.ge.f32.partialorder %v913, 0.0
        %vm940 = vcmp.ge.f32.partialorder %v914, 0.0
        %v941 = vsub.f32 1.0, %v928
        %v942 = vsub.f32 1.0, %v930
        %v943 = vsel %vm939, %v928, %v941
        %v944 = vsel %vm940, %v930, %v942
        %v945 = vsub.f32 0.0, %v936
        %v946 = vsub.f32 0.0, %v938
        %v947 = vsel %vm939, %v936, %v945
        %v948 = vsel %vm940, %v938, %v946
        %v949 = vmul.f32 %v943, %v831
        %v950 = vmul.f32 %v944, %v832
        %v951 = vsub.f32 1.0, %v943
        %v952 = vsub.f32 1.0, %v944
        %v953 = vmul.f32 %v951, %v947
        %v954 = vmul.f32 %v952, %v948
        %v955 = vadd.f32 %v949, %v953
        %v956 = vadd.f32 %v950, %v954
        %957 = vst [vmem:[%s835] sm:$0xff] %v955
        %958 = vst [vmem:[%s835 + $0x8] sm:$0xff] %v956
        %s959 = scalar_lea.vmem [#allocation2], 32
        %v960 = vld [vmem:[%s959] sm:$0xff]
        %v961 = vld [vmem:[%s959 + $0x8] sm:$0xff]
        %962 = vmatprep.subr.mxu0 0.0
        %963 = vmatpush1.msra.mxu0 %v694
        %964 = vmatprep.subr.mxu0 0.0
        %965 = vmatpush1.msra.mxu0 %v695
        %966 = vmatprep.subr.mxu0 0.0
        %967 = vmatpush1.msra.mxu0 %v696
        %968 = vmatprep.subr.mxu0 0.0
        %969 = vmatpush1.msra.mxu0 %v697
        %970 = vmatprep.subr.mxu0 0.0
        %971 = vmatpush1.msra.mxu0 %v698
        %972 = vmatprep.subr.mxu0 0.0
        %973 = vmatpush1.msra.mxu0 %v699
        %974 = vmatprep.subr.mxu0 0.0
        %975 = vmatpush1.msra.mxu0 %v700
        %976 = vmatprep.subr.mxu0 0.0
        %977 = vmatpush1.msra.mxu0 %v701
        %978 = vmatprep.subr.mxu0 0.0
        %979 = vmatpush1.msra.mxu0 %v702
        %980 = vmatprep.subr.mxu0 0.0
        %981 = vmatpush1.msra.mxu0 %v703
        %982 = vmatprep.subr.mxu0 0.0
        %983 = vmatpush1.msra.mxu0 %v704
        %984 = vmatprep.subr.mxu0 0.0
        %985 = vmatpush1.msra.mxu0 %v705
        %986 = vmatprep.subr.mxu0 0.0
        %987 = vmatpush1.msra.mxu0 %v706
        %988 = vmatprep.subr.mxu0 0.0
        %989 = vmatpush1.msra.mxu0 %v707
        %990 = vmatprep.subr.mxu0 0.0
        %991 = vmatpush1.msra.mxu0 %v708
        %992 = vmatprep.subr.mxu0 0.0
        %993 = vmatpush1.msra.mxu0 %v709
        %994 = vmatprep.subr.mxu0 0.0
        %995 = vmatpush1.msra.mxu0 0.0
        %996 = vmatprep.subr.mxu0 0.0
        %997 = vmatpush1.msra.mxu0 0.0
        %998 = vmatprep.subr.mxu0 0.0
        %999 = vmatpush1.msra.mxu0 0.0
        %1000 = vmatprep.subr.mxu0 0.0
        %1001 = vmatpush1.msra.mxu0 0.0
        %1002 = vmatprep.subr.mxu0 0.0
        %1003 = vmatpush1.msra.mxu0 0.0
        %1004 = vmatprep.subr.mxu0 0.0
        %1005 = vmatpush1.msra.mxu0 0.0
        %1006 = vmatprep.subr.mxu0 0.0
        %1007 = vmatpush1.msra.mxu0 0.0
        %1008 = vmatprep.subr.mxu0 0.0
        %1009 = vmatpush1.msra.mxu0 0.0
        %1010 = vmatprep.subr.mxu0 0.0
        %1011 = vmatpush1.msra.mxu0 0.0
        %1012 = vmatprep.subr.mxu0 0.0
        %1013 = vmatpush1.msra.mxu0 0.0
        %1014 = vmatprep.subr.mxu0 0.0
        %1015 = vmatpush1.msra.mxu0 0.0
        %1016 = vmatprep.subr.mxu0 0.0
        %1017 = vmatpush1.msra.mxu0 0.0
        %1018 = vmatprep.subr.mxu0 0.0
        %1019 = vmatpush1.msra.mxu0 0.0
        %1020 = vmatprep.subr.mxu0 0.0
        %1021 = vmatpush1.msra.mxu0 0.0
        %1022 = vmatprep.subr.mxu0 0.0
        %1023 = vmatpush1.msra.mxu0 0.0
        %1024 = vmatprep.subr.mxu0 0.0
        %1025 = vmatpush1.msra.mxu0 0.0
        %1026 = vmatprep.mubr.f32.mxu0 0.0
        %1027 = vmatmul.mubr.f32.gmra.mrb[0].mxu0 %v955
        %v1028 = vpop.f32.mrb[0].mxu0
        %v1029 = vadd.f32 0.0, %v1028
        %v1030 = vpop.f32.mrb[0].mxu0
        %1031 = vmatprep.mubr.f32.mxu0 0.0
        %1032 = vmatmul.mubr.f32.gmra.mrb[0].mxu0 %v956
        %v1033 = vpop.f32.mrb[0].mxu0
        %v1034 = vadd.f32 0.0, %v1033
        %v1035 = vpop.f32.mrb[0].mxu0
        %1036 = vdwg.mxu0
        %v1037 = vadd.f32 %v960, %v1029
        %v1038 = vadd.f32 %v961, %v1034
        %v1039 = vand.u32 2147483647, %v1037
        %v1040 = vand.u32 2147483647, %v1038
        %v1041 = vsub.f32 0.0, %v1039
        %v1042 = vsub.f32 0.0, %v1040
        %v1043 = vmul.f32 %v1041, 1.442695
        %v1044 = vpow.pop %v1043
        %v1045 = vmul.f32 %v1042, 1.442695
        %v1046 = vpow.pop %v1045
        %v1047 = vmul.f32 %v1044, %v1044
        %v1048 = vmul.f32 %v1046, %v1046
        %v1049 = vadd.f32 %v1044, 1.0
        %v1050 = vadd.f32 %v1046, 1.0
        %v1051 = vrcp.pop %v1049
        %v1052 = vmul.f32 1.0, %v1051
        %v1053 = vrcp.pop %v1050
        %v1054 = vmul.f32 1.0, %v1053
        %v1055 = vsub.f32 1.0, %v1047
        %v1056 = vsub.f32 1.0, %v1048
        %v1057 = vadd.f32 %v1047, 1.0
        %v1058 = vadd.f32 %v1048, 1.0
        %v1059 = vrcp.pop %v1057
        %v1060 = vmul.f32 %v1055, %v1059
        %v1061 = vrcp.pop %v1058
        %v1062 = vmul.f32 %v1056, %v1061
        %vm1063 = vcmp.ge.f32.partialorder %v1037, 0.0
        %vm1064 = vcmp.ge.f32.partialorder %v1038, 0.0
        %v1065 = vsub.f32 1.0, %v1052
        %v1066 = vsub.f32 1.0, %v1054
        %v1067 = vsel %vm1063, %v1052, %v1065
        %v1068 = vsel %vm1064, %v1054, %v1066
        %v1069 = vsub.f32 0.0, %v1060
        %v1070 = vsub.f32 0.0, %v1062
        %v1071 = vsel %vm1063, %v1060, %v1069
        %v1072 = vsel %vm1064, %v1062, %v1070
        %v1073 = vmul.f32 %v1067, %v955
        %v1074 = vmul.f32 %v1068, %v956
        %v1075 = vsub.f32 1.0, %v1067
        %v1076 = vsub.f32 1.0, %v1068
        %v1077 = vmul.f32 %v1075, %v1071
        %v1078 = vmul.f32 %v1076, %v1072
        %v1079 = vadd.f32 %v1073, %v1077
        %v1080 = vadd.f32 %v1074, %v1078
        %1081 = vst [vmem:[%s959] sm:$0xff] %v1079
        %1082 = vst [vmem:[%s959 + $0x8] sm:$0xff] %v1080
        %s1083 = scalar_lea.vmem [#allocation2], 48
        %v1084 = vld [vmem:[%s1083] sm:$0xff]
        %v1085 = vld [vmem:[%s1083 + $0x8] sm:$0xff]
        %1086 = vmatprep.subr.mxu0 0.0
        %1087 = vmatpush1.msra.mxu0 %v694
        %1088 = vmatprep.subr.mxu0 0.0
        %1089 = vmatpush1.msra.mxu0 %v695
        %1090 = vmatprep.subr.mxu0 0.0
        %1091 = vmatpush1.msra.mxu0 %v696
        %1092 = vmatprep.subr.mxu0 0.0
        %1093 = vmatpush1.msra.mxu0 %v697
        %1094 = vmatprep.subr.mxu0 0.0
        %1095 = vmatpush1.msra.mxu0 %v698
        %1096 = vmatprep.subr.mxu0 0.0
        %1097 = vmatpush1.msra.mxu0 %v699
        %1098 = vmatprep.subr.mxu0 0.0
        %1099 = vmatpush1.msra.mxu0 %v700
        %1100 = vmatprep.subr.mxu0 0.0
        %1101 = vmatpush1.msra.mxu0 %v701
        %1102 = vmatprep.subr.mxu0 0.0
        %1103 = vmatpush1.msra.mxu0 %v702
        %1104 = vmatprep.subr.mxu0 0.0
        %1105 = vmatpush1.msra.mxu0 %v703
        %1106 = vmatprep.subr.mxu0 0.0
        %1107 = vmatpush1.msra.mxu0 %v704
        %1108 = vmatprep.subr.mxu0 0.0
        %1109 = vmatpush1.msra.mxu0 %v705
        %1110 = vmatprep.subr.mxu0 0.0
        %1111 = vmatpush1.msra.mxu0 %v706
        %1112 = vmatprep.subr.mxu0 0.0
        %1113 = vmatpush1.msra.mxu0 %v707
        %1114 = vmatprep.subr.mxu0 0.0
        %1115 = vmatpush1.msra.mxu0 %v708
        %1116 = vmatprep.subr.mxu0 0.0
        %1117 = vmatpush1.msra.mxu0 %v709
        %1118 = vmatprep.subr.mxu0 0.0
        %1119 = vmatpush1.msra.mxu0 0.0
        %1120 = vmatprep.subr.mxu0 0.0
        %1121 = vmatpush1.msra.mxu0 0.0
        %1122 = vmatprep.subr.mxu0 0.0
        %1123 = vmatpush1.msra.mxu0 0.0
        %1124 = vmatprep.subr.mxu0 0.0
        %1125 = vmatpush1.msra.mxu0 0.0
        %1126 = vmatprep.subr.mxu0 0.0
        %1127 = vmatpush1.msra.mxu0 0.0
        %1128 = vmatprep.subr.mxu0 0.0
        %1129 = vmatpush1.msra.mxu0 0.0
        %1130 = vmatprep.subr.mxu0 0.0
        %1131 = vmatpush1.msra.mxu0 0.0
        %1132 = vmatprep.subr.mxu0 0.0
        %1133 = vmatpush1.msra.mxu0 0.0
        %1134 = vmatprep.subr.mxu0 0.0
        %1135 = vmatpush1.msra.mxu0 0.0
        %1136 = vmatprep.subr.mxu0 0.0
        %1137 = vmatpush1.msra.mxu0 0.0
        %1138 = vmatprep.subr.mxu0 0.0
        %1139 = vmatpush1.msra.mxu0 0.0
        %1140 = vmatprep.subr.mxu0 0.0
        %1141 = vmatpush1.msra.mxu0 0.0
        %1142 = vmatprep.subr.mxu0 0.0
        %1143 = vmatpush1.msra.mxu0 0.0
        %1144 = vmatprep.subr.mxu0 0.0
        %1145 = vmatpush1.msra.mxu0 0.0
        %1146 = vmatprep.subr.mxu0 0.0
        %1147 = vmatpush1.msra.mxu0 0.0
        %1148 = vmatprep.subr.mxu0 0.0
        %1149 = vmatpush1.msra.mxu0 0.0
        %1150 = vmatprep.mubr.f32.mxu0 0.0
        %1151 = vmatmul.mubr.f32.gmra.mrb[0].mxu0 %v1079
        %v1152 = vpop.f32.mrb[0].mxu0
        %v1153 = vadd.f32 0.0, %v1152
        %v1154 = vpop.f32.mrb[0].mxu0
        %1155 = vmatprep.mubr.f32.mxu0 0.0
        %1156 = vmatmul.mubr.f32.gmra.mrb[0].mxu0 %v1080
        %v1157 = vpop.f32.mrb[0].mxu0
        %v1158 = vadd.f32 0.0, %v1157
        %v1159 = vpop.f32.mrb[0].mxu0
        %1160 = vdwg.mxu0
        %v1161 = vadd.f32 %v1084, %v1153
        %v1162 = vadd.f32 %v1085, %v1158
        %v1163 = vand.u32 2147483647, %v1161
        %v1164 = vand.u32 2147483647, %v1162
        %v1165 = vsub.f32 0.0, %v1163
        %v1166 = vsub.f32 0.0, %v1164
        %v1167 = vmul.f32 %v1165, 1.442695
        %v1168 = vpow.pop %v1167
        %v1169 = vmul.f32 %v1166, 1.442695
        %v1170 = vpow.pop %v1169
        %v1171 = vmul.f32 %v1168, %v1168
        %v1172 = vmul.f32 %v1170, %v1170
        %v1173 = vadd.f32 %v1168, 1.0
        %v1174 = vadd.f32 %v1170, 1.0
        %v1175 = vrcp.pop %v1173
        %v1176 = vmul.f32 1.0, %v1175
        %v1177 = vrcp.pop %v1174
        %v1178 = vmul.f32 1.0, %v1177
        %v1179 = vsub.f32 1.0, %v1171
        %v1180 = vsub.f32 1.0, %v1172
        %v1181 = vadd.f32 %v1171, 1.0
        %v1182 = vadd.f32 %v1172, 1.0
        %v1183 = vrcp.pop %v1181
        %v1184 = vmul.f32 %v1179, %v1183
        %v1185 = vrcp.pop %v1182
        %v1186 = vmul.f32 %v1180, %v1185
        %vm1187 = vcmp.ge.f32.partialorder %v1161, 0.0
        %vm1188 = vcmp.ge.f32.partialorder %v1162, 0.0
        %v1189 = vsub.f32 1.0, %v1176
        %v1190 = vsub.f32 1.0, %v1178
        %v1191 = vsel %vm1187, %v1176, %v1189
        %v1192 = vsel %vm1188, %v1178, %v1190
        %v1193 = vsub.f32 0.0, %v1184
        %v1194 = vsub.f32 0.0, %v1186
        %v1195 = vsel %vm1187, %v1184, %v1193
        %v1196 = vsel %vm1188, %v1186, %v1194
        %v1197 = vmul.f32 %v1191, %v1079
        %v1198 = vmul.f32 %v1192, %v1080
        %v1199 = vsub.f32 1.0, %v1191
        %v1200 = vsub.f32 1.0, %v1192
        %v1201 = vmul.f32 %v1199, %v1195
        %v1202 = vmul.f32 %v1200, %v1196
        %v1203 = vadd.f32 %v1197, %v1201
        %v1204 = vadd.f32 %v1198, %v1202
        %1205 = vst [vmem:[%s1083] sm:$0xff] %v1203
        %1206 = vst [vmem:[%s1083 + $0x8] sm:$0xff] %v1204
        %s1207 = scalar_lea.vmem [#allocation2], 64
        %v1208 = vld [vmem:[%s1207] sm:$0xff]
        %v1209 = vld [vmem:[%s1207 + $0x8] sm:$0xff]
        %1210 = vmatprep.subr.mxu0 0.0
        %1211 = vmatpush1.msra.mxu0 %v694
        %1212 = vmatprep.subr.mxu0 0.0
        %1213 = vmatpush1.msra.mxu0 %v695
        %1214 = vmatprep.subr.mxu0 0.0
        %1215 = vmatpush1.msra.mxu0 %v696
        %1216 = vmatprep.subr.mxu0 0.0
        %1217 = vmatpush1.msra.mxu0 %v697
        %1218 = vmatprep.subr.mxu0 0.0
        %1219 = vmatpush1.msra.mxu0 %v698
        %1220 = vmatprep.subr.mxu0 0.0
        %1221 = vmatpush1.msra.mxu0 %v699
        %1222 = vmatprep.subr.mxu0 0.0
        %1223 = vmatpush1.msra.mxu0 %v700
        %1224 = vmatprep.subr.mxu0 0.0
        %1225 = vmatpush1.msra.mxu0 %v701
        %1226 = vmatprep.subr.mxu0 0.0
        %1227 = vmatpush1.msra.mxu0 %v702
        %1228 = vmatprep.subr.mxu0 0.0
        %1229 = vmatpush1.msra.mxu0 %v703
        %1230 = vmatprep.subr.mxu0 0.0
        %1231 = vmatpush1.msra.mxu0 %v704
        %1232 = vmatprep.subr.mxu0 0.0
        %1233 = vmatpush1.msra.mxu0 %v705
        %1234 = vmatprep.subr.mxu0 0.0
        %1235 = vmatpush1.msra.mxu0 %v706
        %1236 = vmatprep.subr.mxu0 0.0
        %1237 = vmatpush1.msra.mxu0 %v707
        %1238 = vmatprep.subr.mxu0 0.0
        %1239 = vmatpush1.msra.mxu0 %v708
        %1240 = vmatprep.subr.mxu0 0.0
        %1241 = vmatpush1.msra.mxu0 %v709
        %1242 = vmatprep.subr.mxu0 0.0
        %1243 = vmatpush1.msra.mxu0 0.0
        %1244 = vmatprep.subr.mxu0 0.0
        %1245 = vmatpush1.msra.mxu0 0.0
        %1246 = vmatprep.subr.mxu0 0.0
        %1247 = vmatpush1.msra.mxu0 0.0
        %1248 = vmatprep.subr.mxu0 0.0
        %1249 = vmatpush1.msra.mxu0 0.0
        %1250 = vmatprep.subr.mxu0 0.0
        %1251 = vmatpush1.msra.mxu0 0.0
        %1252 = vmatprep.subr.mxu0 0.0
        %1253 = vmatpush1.msra.mxu0 0.0
        %1254 = vmatprep.subr.mxu0 0.0
        %1255 = vmatpush1.msra.mxu0 0.0
        %1256 = vmatprep.subr.mxu0 0.0
        %1257 = vmatpush1.msra.mxu0 0.0
        %1258 = vmatprep.subr.mxu0 0.0
        %1259 = vmatpush1.msra.mxu0 0.0
        %1260 = vmatprep.subr.mxu0 0.0
        %1261 = vmatpush1.msra.mxu0 0.0
        %1262 = vmatprep.subr.mxu0 0.0
        %1263 = vmatpush1.msra.mxu0 0.0
        %1264 = vmatprep.subr.mxu0 0.0
        %1265 = vmatpush1.msra.mxu0 0.0
        %1266 = vmatprep.subr.mxu0 0.0
        %1267 = vmatpush1.msra.mxu0 0.0
        %1268 = vmatprep.subr.mxu0 0.0
        %1269 = vmatpush1.msra.mxu0 0.0
        %1270 = vmatprep.subr.mxu0 0.0
        %1271 = vmatpush1.msra.mxu0 0.0
        %1272 = vmatprep.subr.mxu0 0.0
        %1273 = vmatpush1.msra.mxu0 0.0
        %1274 = vmatprep.mubr.f32.mxu0 0.0
        %1275 = vmatmul.mubr.f32.gmra.mrb[0].mxu0 %v1203
        %v1276 = vpop.f32.mrb[0].mxu0
        %v1277 = vadd.f32 0.0, %v1276
        %v1278 = vpop.f32.mrb[0].mxu0
        %1279 = vmatprep.mubr.f32.mxu0 0.0
        %1280 = vmatmul.mubr.f32.gmra.mrb[0].mxu0 %v1204
        %v1281 = vpop.f32.mrb[0].mxu0
        %v1282 = vadd.f32 0.0, %v1281
        %v1283 = vpop.f32.mrb[0].mxu0
        %1284 = vdwg.mxu0
        %v1285 = vadd.f32 %v1208, %v1277
        %v1286 = vadd.f32 %v1209, %v1282
        %v1287 = vand.u32 2147483647, %v1285
        %v1288 = vand.u32 2147483647, %v1286
        %v1289 = vsub.f32 0.0, %v1287
        %v1290 = vsub.f32 0.0, %v1288
        %v1291 = vmul.f32 %v1289, 1.442695
        %v1292 = vpow.pop %v1291
        %v1293 = vmul.f32 %v1290, 1.442695
        %v1294 = vpow.pop %v1293
        %v1295 = vmul.f32 %v1292, %v1292
        %v1296 = vmul.f32 %v1294, %v1294
        %v1297 = vadd.f32 %v1292, 1.0
        %v1298 = vadd.f32 %v1294, 1.0
        %v1299 = vrcp.pop %v1297
        %v1300 = vmul.f32 1.0, %v1299
        %v1301 = vrcp.pop %v1298
        %v1302 = vmul.f32 1.0, %v1301
        %v1303 = vsub.f32 1.0, %v1295
        %v1304 = vsub.f32 1.0, %v1296
        %v1305 = vadd.f32 %v1295, 1.0
        %v1306 = vadd.f32 %v1296, 1.0
        %v1307 = vrcp.pop %v1305
        %v1308 = vmul.f32 %v1303, %v1307
        %v1309 = vrcp.pop %v1306
        %v1310 = vmul.f32 %v1304, %v1309
        %vm1311 = vcmp.ge.f32.partialorder %v1285, 0.0
        %vm1312 = vcmp.ge.f32.partialorder %v1286, 0.0
        %v1313 = vsub.f32 1.0, %v1300
        %v1314 = vsub.f32 1.0, %v1302
        %v1315 = vsel %vm1311, %v1300, %v1313
        %v1316 = vsel %vm1312, %v1302, %v1314
        %v1317 = vsub.f32 0.0, %v1308
        %v1318 = vsub.f32 0.0, %v1310
        %v1319 = vsel %vm1311, %v1308, %v1317
        %v1320 = vsel %vm1312, %v1310, %v1318
        %v1321 = vmul.f32 %v1315, %v1203
        %v1322 = vmul.f32 %v1316, %v1204
        %v1323 = vsub.f32 1.0, %v1315
        %v1324 = vsub.f32 1.0, %v1316
        %v1325 = vmul.f32 %v1323, %v1319
        %v1326 = vmul.f32 %v1324, %v1320
        %v1327 = vadd.f32 %v1321, %v1325
        %v1328 = vadd.f32 %v1322, %v1326
        %1329 = vst [vmem:[%s1207] sm:$0xff] %v1327
        %1330 = vst [vmem:[%s1207 + $0x8] sm:$0xff] %v1328
        %s1331 = scalar_lea.vmem [#allocation2], 80
        %v1332 = vld [vmem:[%s1331] sm:$0xff]
        %v1333 = vld [vmem:[%s1331 + $0x8] sm:$0xff]
        %1334 = vmatprep.subr.mxu0 0.0
        %1335 = vmatpush1.msra.mxu0 %v694
        %1336 = vmatprep.subr.mxu0 0.0
        %1337 = vmatpush1.msra.mxu0 %v695
        %1338 = vmatprep.subr.mxu0 0.0
        %1339 = vmatpush1.msra.mxu0 %v696
        %1340 = vmatprep.subr.mxu0 0.0
        %1341 = vmatpush1.msra.mxu0 %v697
        %1342 = vmatprep.subr.mxu0 0.0
        %1343 = vmatpush1.msra.mxu0 %v698
        %1344 = vmatprep.subr.mxu0 0.0
        %1345 = vmatpush1.msra.mxu0 %v699
        %1346 = vmatprep.subr.mxu0 0.0
        %1347 = vmatpush1.msra.mxu0 %v700
        %1348 = vmatprep.subr.mxu0 0.0
        %1349 = vmatpush1.msra.mxu0 %v701
        %1350 = vmatprep.subr.mxu0 0.0
        %1351 = vmatpush1.msra.mxu0 %v702
        %1352 = vmatprep.subr.mxu0 0.0
        %1353 = vmatpush1.msra.mxu0 %v703
        %1354 = vmatprep.subr.mxu0 0.0
        %1355 = vmatpush1.msra.mxu0 %v704
        %1356 = vmatprep.subr.mxu0 0.0
        %1357 = vmatpush1.msra.mxu0 %v705
        %1358 = vmatprep.subr.mxu0 0.0
        %1359 = vmatpush1.msra.mxu0 %v706
        %1360 = vmatprep.subr.mxu0 0.0
        %1361 = vmatpush1.msra.mxu0 %v707
        %1362 = vmatprep.subr.mxu0 0.0
        %1363 = vmatpush1.msra.mxu0 %v708
        %1364 = vmatprep.subr.mxu0 0.0
        %1365 = vmatpush1.msra.mxu0 %v709
        %1366 = vmatprep.subr.mxu0 0.0
        %1367 = vmatpush1.msra.mxu0 0.0
        %1368 = vmatprep.subr.mxu0 0.0
        %1369 = vmatpush1.msra.mxu0 0.0
        %1370 = vmatprep.subr.mxu0 0.0
        %1371 = vmatpush1.msra.mxu0 0.0
        %1372 = vmatprep.subr.mxu0 0.0
        %1373 = vmatpush1.msra.mxu0 0.0
        %1374 = vmatprep.subr.mxu0 0.0
        %1375 = vmatpush1.msra.mxu0 0.0
        %1376 = vmatprep.subr.mxu0 0.0
        %1377 = vmatpush1.msra.mxu0 0.0
        %1378 = vmatprep.subr.mxu0 0.0
        %1379 = vmatpush1.msra.mxu0 0.0
        %1380 = vmatprep.subr.mxu0 0.0
        %1381 = vmatpush1.msra.mxu0 0.0
        %1382 = vmatprep.subr.mxu0 0.0
        %1383 = vmatpush1.msra.mxu0 0.0
        %1384 = vmatprep.subr.mxu0 0.0
        %1385 = vmatpush1.msra.mxu0 0.0
        %1386 = vmatprep.subr.mxu0 0.0
        %1387 = vmatpush1.msra.mxu0 0.0
        %1388 = vmatprep.subr.mxu0 0.0
        %1389 = vmatpush1.msra.mxu0 0.0
        %1390 = vmatprep.subr.mxu0 0.0
        %1391 = vmatpush1.msra.mxu0 0.0
        %1392 = vmatprep.subr.mxu0 0.0
        %1393 = vmatpush1.msra.mxu0 0.0
        %1394 = vmatprep.subr.mxu0 0.0
        %1395 = vmatpush1.msra.mxu0 0.0
        %1396 = vmatprep.subr.mxu0 0.0
        %1397 = vmatpush1.msra.mxu0 0.0
        %1398 = vmatprep.mubr.f32.mxu0 0.0
        %1399 = vmatmul.mubr.f32.gmra.mrb[0].mxu0 %v1327
        %v1400 = vpop.f32.mrb[0].mxu0
        %v1401 = vadd.f32 0.0, %v1400
        %v1402 = vpop.f32.mrb[0].mxu0
        %1403 = vmatprep.mubr.f32.mxu0 0.0
        %1404 = vmatmul.mubr.f32.gmra.mrb[0].mxu0 %v1328
        %v1405 = vpop.f32.mrb[0].mxu0
        %v1406 = vadd.f32 0.0, %v1405
        %v1407 = vpop.f32.mrb[0].mxu0
        %1408 = vdwg.mxu0
        %v1409 = vadd.f32 %v1332, %v1401
        %v1410 = vadd.f32 %v1333, %v1406
        %v1411 = vand.u32 2147483647, %v1409
        %v1412 = vand.u32 2147483647, %v1410
        %v1413 = vsub.f32 0.0, %v1411
        %v1414 = vsub.f32 0.0, %v1412
        %v1415 = vmul.f32 %v1413, 1.442695
        %v1416 = vpow.pop %v1415
        %v1417 = vmul.f32 %v1414, 1.442695
        %v1418 = vpow.pop %v1417
        %v1419 = vmul.f32 %v1416, %v1416
        %v1420 = vmul.f32 %v1418, %v1418
        %v1421 = vadd.f32 %v1416, 1.0
        %v1422 = vadd.f32 %v1418, 1.0
        %v1423 = vrcp.pop %v1421
        %v1424 = vmul.f32 1.0, %v1423
        %v1425 = vrcp.pop %v1422
        %v1426 = vmul.f32 1.0, %v1425
        %v1427 = vsub.f32 1.0, %v1419
        %v1428 = vsub.f32 1.0, %v1420
        %v1429 = vadd.f32 %v1419, 1.0
        %v1430 = vadd.f32 %v1420, 1.0
        %v1431 = vrcp.pop %v1429
        %v1432 = vmul.f32 %v1427, %v1431
        %v1433 = vrcp.pop %v1430
        %v1434 = vmul.f32 %v1428, %v1433
        %vm1435 = vcmp.ge.f32.partialorder %v1409, 0.0
        %vm1436 = vcmp.ge.f32.partialorder %v1410, 0.0
        %v1437 = vsub.f32 1.0, %v1424
        %v1438 = vsub.f32 1.0, %v1426
        %v1439 = vsel %vm1435, %v1424, %v1437
        %v1440 = vsel %vm1436, %v1426, %v1438
        %v1441 = vsub.f32 0.0, %v1432
        %v1442 = vsub.f32 0.0, %v1434
        %v1443 = vsel %vm1435, %v1432, %v1441
        %v1444 = vsel %vm1436, %v1434, %v1442
        %v1445 = vmul.f32 %v1439, %v1327
        %v1446 = vmul.f32 %v1440, %v1328
        %v1447 = vsub.f32 1.0, %v1439
        %v1448 = vsub.f32 1.0, %v1440
        %v1449 = vmul.f32 %v1447, %v1443
        %v1450 = vmul.f32 %v1448, %v1444
        %v1451 = vadd.f32 %v1445, %v1449
        %v1452 = vadd.f32 %v1446, %v1450
        %1453 = vst [vmem:[%s1331] sm:$0xff] %v1451
        %1454 = vst [vmem:[%s1331 + $0x8] sm:$0xff] %v1452
        %s1455 = scalar_lea.vmem [#allocation2], 96
        %v1456 = vld [vmem:[%s1455] sm:$0xff]
        %v1457 = vld [vmem:[%s1455 + $0x8] sm:$0xff]
        %1458 = vmatprep.subr.mxu0 0.0
        %1459 = vmatpush1.msra.mxu0 %v694
        %1460 = vmatprep.subr.mxu0 0.0
        %1461 = vmatpush1.msra.mxu0 %v695
        %1462 = vmatprep.subr.mxu0 0.0
        %1463 = vmatpush1.msra.mxu0 %v696
        %1464 = vmatprep.subr.mxu0 0.0
        %1465 = vmatpush1.msra.mxu0 %v697
        %1466 = vmatprep.subr.mxu0 0.0
        %1467 = vmatpush1.msra.mxu0 %v698
        %1468 = vmatprep.subr.mxu0 0.0
        %1469 = vmatpush1.msra.mxu0 %v699
        %1470 = vmatprep.subr.mxu0 0.0
        %1471 = vmatpush1.msra.mxu0 %v700
        %1472 = vmatprep.subr.mxu0 0.0
        %1473 = vmatpush1.msra.mxu0 %v701
        %1474 = vmatprep.subr.mxu0 0.0
        %1475 = vmatpush1.msra.mxu0 %v702
        %1476 = vmatprep.subr.mxu0 0.0
        %1477 = vmatpush1.msra.mxu0 %v703
        %1478 = vmatprep.subr.mxu0 0.0
        %1479 = vmatpush1.msra.mxu0 %v704
        %1480 = vmatprep.subr.mxu0 0.0
        %1481 = vmatpush1.msra.mxu0 %v705
        %1482 = vmatprep.subr.mxu0 0.0
        %1483 = vmatpush1.msra.mxu0 %v706
        %1484 = vmatprep.subr.mxu0 0.0
        %1485 = vmatpush1.msra.mxu0 %v707
        %1486 = vmatprep.subr.mxu0 0.0
        %1487 = vmatpush1.msra.mxu0 %v708
        %1488 = vmatprep.subr.mxu0 0.0
        %1489 = vmatpush1.msra.mxu0 %v709
        %1490 = vmatprep.subr.mxu0 0.0
        %1491 = vmatpush1.msra.mxu0 0.0
        %1492 = vmatprep.subr.mxu0 0.0
        %1493 = vmatpush1.msra.mxu0 0.0
        %1494 = vmatprep.subr.mxu0 0.0
        %1495 = vmatpush1.msra.mxu0 0.0
        %1496 = vmatprep.subr.mxu0 0.0
        %1497 = vmatpush1.msra.mxu0 0.0
        %1498 = vmatprep.subr.mxu0 0.0
        %1499 = vmatpush1.msra.mxu0 0.0
        %1500 = vmatprep.subr.mxu0 0.0
        %1501 = vmatpush1.msra.mxu0 0.0
        %1502 = vmatprep.subr.mxu0 0.0
        %1503 = vmatpush1.msra.mxu0 0.0
        %1504 = vmatprep.subr.mxu0 0.0
        %1505 = vmatpush1.msra.mxu0 0.0
        %1506 = vmatprep.subr.mxu0 0.0
        %1507 = vmatpush1.msra.mxu0 0.0
        %1508 = vmatprep.subr.mxu0 0.0
        %1509 = vmatpush1.msra.mxu0 0.0
        %1510 = vmatprep.subr.mxu0 0.0
        %1511 = vmatpush1.msra.mxu0 0.0
        %1512 = vmatprep.subr.mxu0 0.0
        %1513 = vmatpush1.msra.mxu0 0.0
        %1514 = vmatprep.subr.mxu0 0.0
        %1515 = vmatpush1.msra.mxu0 0.0
        %1516 = vmatprep.subr.mxu0 0.0
        %1517 = vmatpush1.msra.mxu0 0.0
        %1518 = vmatprep.subr.mxu0 0.0
        %1519 = vmatpush1.msra.mxu0 0.0
        %1520 = vmatprep.subr.mxu0 0.0
        %1521 = vmatpush1.msra.mxu0 0.0
        %1522 = vmatprep.mubr.f32.mxu0 0.0
        %1523 = vmatmul.mubr.f32.gmra.mrb[0].mxu0 %v1451
        %v1524 = vpop.f32.mrb[0].mxu0
        %v1525 = vadd.f32 0.0, %v1524
        %v1526 = vpop.f32.mrb[0].mxu0
        %1527 = vmatprep.mubr.f32.mxu0 0.0
        %1528 = vmatmul.mubr.f32.gmra.mrb[0].mxu0 %v1452
        %v1529 = vpop.f32.mrb[0].mxu0
        %v1530 = vadd.f32 0.0, %v1529
        %v1531 = vpop.f32.mrb[0].mxu0
        %1532 = vdwg.mxu0
        %v1533 = vadd.f32 %v1456, %v1525
        %v1534 = vadd.f32 %v1457, %v1530
        %v1535 = vand.u32 2147483647, %v1533
        %v1536 = vand.u32 2147483647, %v1534
        %v1537 = vsub.f32 0.0, %v1535
        %v1538 = vsub.f32 0.0, %v1536
        %v1539 = vmul.f32 %v1537, 1.442695
        %v1540 = vpow.pop %v1539
        %v1541 = vmul.f32 %v1538, 1.442695
        %v1542 = vpow.pop %v1541
        %v1543 = vmul.f32 %v1540, %v1540
        %v1544 = vmul.f32 %v1542, %v1542
        %v1545 = vadd.f32 %v1540, 1.0
        %v1546 = vadd.f32 %v1542, 1.0
        %v1547 = vrcp.pop %v1545
        %v1548 = vmul.f32 1.0, %v1547
        %v1549 = vrcp.pop %v1546
        %v1550 = vmul.f32 1.0, %v1549
        %v1551 = vsub.f32 1.0, %v1543
        %v1552 = vsub.f32 1.0, %v1544
        %v1553 = vadd.f32 %v1543, 1.0
        %v1554 = vadd.f32 %v1544, 1.0
        %v1555 = vrcp.pop %v1553
        %v1556 = vmul.f32 %v1551, %v1555
        %v1557 = vrcp.pop %v1554
        %v1558 = vmul.f32 %v1552, %v1557
        %vm1559 = vcmp.ge.f32.partialorder %v1533, 0.0
        %vm1560 = vcmp.ge.f32.partialorder %v1534, 0.0
        %v1561 = vsub.f32 1.0, %v1548
        %v1562 = vsub.f32 1.0, %v1550
        %v1563 = vsel %vm1559, %v1548, %v1561
        %v1564 = vsel %vm1560, %v1550, %v1562
        %v1565 = vsub.f32 0.0, %v1556
        %v1566 = vsub.f32 0.0, %v1558
        %v1567 = vsel %vm1559, %v1556, %v1565
        %v1568 = vsel %vm1560, %v1558, %v1566
        %v1569 = vmul.f32 %v1563, %v1451
        %v1570 = vmul.f32 %v1564, %v1452
        %v1571 = vsub.f32 1.0, %v1563
        %v1572 = vsub.f32 1.0, %v1564
        %v1573 = vmul.f32 %v1571, %v1567
        %v1574 = vmul.f32 %v1572, %v1568
        %v1575 = vadd.f32 %v1569, %v1573
        %v1576 = vadd.f32 %v1570, %v1574
        %1577 = vst [vmem:[%s1455] sm:$0xff] %v1575
        %1578 = vst [vmem:[%s1455 + $0x8] sm:$0xff] %v1576
        %s1579 = scalar_lea.vmem [#allocation2], 112
        %v1580 = vld [vmem:[%s1579] sm:$0xff]
        %v1581 = vld [vmem:[%s1579 + $0x8] sm:$0xff]
        %1582 = vmatprep.subr.mxu0 0.0
        %1583 = vmatpush1.msra.mxu0 %v694
        %1584 = vmatprep.subr.mxu0 0.0
        %1585 = vmatpush1.msra.mxu0 %v695
        %1586 = vmatprep.subr.mxu0 0.0
        %1587 = vmatpush1.msra.mxu0 %v696
        %1588 = vmatprep.subr.mxu0 0.0
        %1589 = vmatpush1.msra.mxu0 %v697
        %1590 = vmatprep.subr.mxu0 0.0
        %1591 = vmatpush1.msra.mxu0 %v698
        %1592 = vmatprep.subr.mxu0 0.0
        %1593 = vmatpush1.msra.mxu0 %v699
        %1594 = vmatprep.subr.mxu0 0.0
        %1595 = vmatpush1.msra.mxu0 %v700
        %1596 = vmatprep.subr.mxu0 0.0
        %1597 = vmatpush1.msra.mxu0 %v701
        %1598 = vmatprep.subr.mxu0 0.0
        %1599 = vmatpush1.msra.mxu0 %v702
        %1600 = vmatprep.subr.mxu0 0.0
        %1601 = vmatpush1.msra.mxu0 %v703
        %1602 = vmatprep.subr.mxu0 0.0
        %1603 = vmatpush1.msra.mxu0 %v704
        %1604 = vmatprep.subr.mxu0 0.0
        %1605 = vmatpush1.msra.mxu0 %v705
        %1606 = vmatprep.subr.mxu0 0.0
        %1607 = vmatpush1.msra.mxu0 %v706
        %1608 = vmatprep.subr.mxu0 0.0
        %1609 = vmatpush1.msra.mxu0 %v707
        %1610 = vmatprep.subr.mxu0 0.0
        %1611 = vmatpush1.msra.mxu0 %v708
        %1612 = vmatprep.subr.mxu0 0.0
        %1613 = vmatpush1.msra.mxu0 %v709
        %1614 = vmatprep.subr.mxu0 0.0
        %1615 = vmatpush1.msra.mxu0 0.0
        %1616 = vmatprep.subr.mxu0 0.0
        %1617 = vmatpush1.msra.mxu0 0.0
        %1618 = vmatprep.subr.mxu0 0.0
        %1619 = vmatpush1.msra.mxu0 0.0
        %1620 = vmatprep.subr.mxu0 0.0
        %1621 = vmatpush1.msra.mxu0 0.0
        %1622 = vmatprep.subr.mxu0 0.0
        %1623 = vmatpush1.msra.mxu0 0.0
        %1624 = vmatprep.subr.mxu0 0.0
        %1625 = vmatpush1.msra.mxu0 0.0
        %1626 = vmatprep.subr.mxu0 0.0
        %1627 = vmatpush1.msra.mxu0 0.0
        %1628 = vmatprep.subr.mxu0 0.0
        %1629 = vmatpush1.msra.mxu0 0.0
        %1630 = vmatprep.subr.mxu0 0.0
        %1631 = vmatpush1.msra.mxu0 0.0
        %1632 = vmatprep.subr.mxu0 0.0
        %1633 = vmatpush1.msra.mxu0 0.0
        %1634 = vmatprep.subr.mxu0 0.0
        %1635 = vmatpush1.msra.mxu0 0.0
        %1636 = vmatprep.subr.mxu0 0.0
        %1637 = vmatpush1.msra.mxu0 0.0
        %1638 = vmatprep.subr.mxu0 0.0
        %1639 = vmatpush1.msra.mxu0 0.0
        %1640 = vmatprep.subr.mxu0 0.0
        %1641 = vmatpush1.msra.mxu0 0.0
        %1642 = vmatprep.subr.mxu0 0.0
        %1643 = vmatpush1.msra.mxu0 0.0
        %1644 = vmatprep.subr.mxu0 0.0
        %1645 = vmatpush1.msra.mxu0 0.0
        %1646 = vmatprep.mubr.f32.mxu0 0.0
        %1647 = vmatmul.mubr.f32.gmra.mrb[0].mxu0 %v1575
        %v1648 = vpop.f32.mrb[0].mxu0
        %v1649 = vadd.f32 0.0, %v1648
        %v1650 = vpop.f32.mrb[0].mxu0
        %1651 = vmatprep.mubr.f32.mxu0 0.0
        %1652 = vmatmul.mubr.f32.gmra.mrb[0].mxu0 %v1576
        %v1653 = vpop.f32.mrb[0].mxu0
        %v1654 = vadd.f32 0.0, %v1653
        %v1655 = vpop.f32.mrb[0].mxu0
        %1656 = vdwg.mxu0
        %v1657 = vadd.f32 %v1580, %v1649
        %v1658 = vadd.f32 %v1581, %v1654
        %v1659 = vand.u32 2147483647, %v1657
        %v1660 = vand.u32 2147483647, %v1658
        %v1661 = vsub.f32 0.0, %v1659
        %v1662 = vsub.f32 0.0, %v1660
        %v1663 = vmul.f32 %v1661, 1.442695
        %v1664 = vpow.pop %v1663
        %v1665 = vmul.f32 %v1662, 1.442695
        %v1666 = vpow.pop %v1665
        %v1667 = vmul.f32 %v1664, %v1664
        %v1668 = vmul.f32 %v1666, %v1666
        %v1669 = vadd.f32 %v1664, 1.0
        %v1670 = vadd.f32 %v1666, 1.0
        %v1671 = vrcp.pop %v1669
        %v1672 = vmul.f32 1.0, %v1671
        %v1673 = vrcp.pop %v1670
        %v1674 = vmul.f32 1.0, %v1673
        %v1675 = vsub.f32 1.0, %v1667
        %v1676 = vsub.f32 1.0, %v1668
        %v1677 = vadd.f32 %v1667, 1.0
        %v1678 = vadd.f32 %v1668, 1.0
        %v1679 = vrcp.pop %v1677
        %v1680 = vmul.f32 %v1675, %v1679
        %v1681 = vrcp.pop %v1678
        %v1682 = vmul.f32 %v1676, %v1681
        %vm1683 = vcmp.ge.f32.partialorder %v1657, 0.0
        %vm1684 = vcmp.ge.f32.partialorder %v1658, 0.0
        %v1685 = vsub.f32 1.0, %v1672
        %v1686 = vsub.f32 1.0, %v1674
        %v1687 = vsel %vm1683, %v1672, %v1685
        %v1688 = vsel %vm1684, %v1674, %v1686
        %v1689 = vsub.f32 0.0, %v1680
        %v1690 = vsub.f32 0.0, %v1682
        %v1691 = vsel %vm1683, %v1680, %v1689
        %v1692 = vsel %vm1684, %v1682, %v1690
        %v1693 = vmul.f32 %v1687, %v1575
        %v1694 = vmul.f32 %v1688, %v1576
        %v1695 = vsub.f32 1.0, %v1687
        %v1696 = vsub.f32 1.0, %v1688
        %v1697 = vmul.f32 %v1695, %v1691
        %v1698 = vmul.f32 %v1696, %v1692
        %v1699 = vadd.f32 %v1693, %v1697
        %v1700 = vadd.f32 %v1694, %v1698
        %1701 = vst [vmem:[%s1579] sm:$0xff] %v1699
        %1702 = vst [vmem:[%s1579 + $0x8] sm:$0xff] %v1700
        %1703 = vst [vmem:[%s440] sm:$0xff] %v1699
        %1704 = vst [vmem:[%s440 + $0x8] sm:$0xff] %v1700
        %v1705 = vld [vmem:[#allocation2] sm:$0xff]
        %v1706 = vld [vmem:[#allocation2 + $0x8] sm:$0xff]
        %v1707 = vld [vmem:[#allocation2 + $0x10] sm:$0xff]
        %v1708 = vld [vmem:[#allocation2 + $0x18] sm:$0xff]
        %v1709 = vld [vmem:[#allocation2 + $0x20] sm:$0xff]
        %v1710 = vld [vmem:[#allocation2 + $0x28] sm:$0xff]
        %v1711 = vld [vmem:[#allocation2 + $0x30] sm:$0xff]
        %v1712 = vld [vmem:[#allocation2 + $0x38] sm:$0xff]
        %v1713 = vld [vmem:[#allocation2 + $0x40] sm:$0xff]
        %v1714 = vld [vmem:[#allocation2 + $0x48] sm:$0xff]
        %v1715 = vld [vmem:[#allocation2 + $0x50] sm:$0xff]
        %v1716 = vld [vmem:[#allocation2 + $0x58] sm:$0xff]
        %v1717 = vld [vmem:[#allocation2 + $0x60] sm:$0xff]
        %v1718 = vld [vmem:[#allocation2 + $0x68] sm:$0xff]
        %v1719 = vld [vmem:[#allocation2 + $0x70] sm:$0xff]
        %v1720 = vld [vmem:[#allocation2 + $0x78] sm:$0xff]
        %v1721 = vld [vmem:[%s5] sm:$0xff]
        %v1722 = vld [vmem:[%s5 + $0x8] sm:$0xff]
        %v1723 = vld [vmem:[%s5 + $0x10] sm:$0xff]
        %v1724 = vld [vmem:[%s5 + $0x18] sm:$0xff]
        %v1725 = vld [vmem:[%s5 + $0x20] sm:$0xff]
        %v1726 = vld [vmem:[%s5 + $0x28] sm:$0xff]
        %v1727 = vld [vmem:[%s5 + $0x30] sm:$0xff]
        %v1728 = vld [vmem:[%s5 + $0x38] sm:$0xff]
        %v1729 = vld [vmem:[%s5 + $0x40] sm:$0xff]
        %v1730 = vld [vmem:[%s5 + $0x48] sm:$0xff]
        %v1731 = vld [vmem:[%s5 + $0x50] sm:$0xff]
        %v1732 = vld [vmem:[%s5 + $0x58] sm:$0xff]
        %v1733 = vld [vmem:[%s5 + $0x60] sm:$0xff]
        %v1734 = vld [vmem:[%s5 + $0x68] sm:$0xff]
        %v1735 = vld [vmem:[%s5 + $0x70] sm:$0xff]
        %v1736 = vld [vmem:[%s5 + $0x78] sm:$0xff]
        %v1737 = vld [vmem:[%s6] sm:$0x1]
        %v1739 = vlaneseq
        %v1740 = vshrl.u32 %v1739, 7
        %v1741 = vsub.s32 0, %v1740
        %v1742 = vrot.slane %v1737, %v1741
        %1744 = vmatprep.subr.mxu0 0.0
        %1745 = vmatpush1.msra.mxu0 %v1721
        %1746 = vmatprep.subr.mxu0 0.0
        %1747 = vmatpush1.msra.mxu0 %v1722
        %1748 = vmatprep.subr.mxu0 0.0
        %1749 = vmatpush1.msra.mxu0 %v1723
        %1750 = vmatprep.subr.mxu0 0.0
        %1751 = vmatpush1.msra.mxu0 %v1724
        %1752 = vmatprep.subr.mxu0 0.0
        %1753 = vmatpush1.msra.mxu0 %v1725
        %1754 = vmatprep.subr.mxu0 0.0
        %1755 = vmatpush1.msra.mxu0 %v1726
        %1756 = vmatprep.subr.mxu0 0.0
        %1757 = vmatpush1.msra.mxu0 %v1727
        %1758 = vmatprep.subr.mxu0 0.0
        %1759 = vmatpush1.msra.mxu0 %v1728
        %1760 = vmatprep.subr.mxu0 0.0
        %1761 = vmatpush1.msra.mxu0 %v1729
        %1762 = vmatprep.subr.mxu0 0.0
        %1763 = vmatpush1.msra.mxu0 %v1730
        %1764 = vmatprep.subr.mxu0 0.0
        %1765 = vmatpush1.msra.mxu0 %v1731
        %1766 = vmatprep.subr.mxu0 0.0
        %1767 = vmatpush1.msra.mxu0 %v1732
        %1768 = vmatprep.subr.mxu0 0.0
        %1769 = vmatpush1.msra.mxu0 %v1733
        %1770 = vmatprep.subr.mxu0 0.0
        %1771 = vmatpush1.msra.mxu0 %v1734
        %1772 = vmatprep.subr.mxu0 0.0
        %1773 = vmatpush1.msra.mxu0 %v1735
        %1774 = vmatprep.subr.mxu0 0.0
        %1775 = vmatpush1.msra.mxu0 %v1736
        %1776 = vmatprep.subr.mxu0 0.0
        %1777 = vmatpush1.msra.mxu0 0.0
        %1778 = vmatprep.subr.mxu0 0.0
        %1779 = vmatpush1.msra.mxu0 0.0
        %1780 = vmatprep.subr.mxu0 0.0
        %1781 = vmatpush1.msra.mxu0 0.0
        %1782 = vmatprep.subr.mxu0 0.0
        %1783 = vmatpush1.msra.mxu0 0.0
        %1784 = vmatprep.subr.mxu0 0.0
        %1785 = vmatpush1.msra.mxu0 0.0
        %1786 = vmatprep.subr.mxu0 0.0
        %1787 = vmatpush1.msra.mxu0 0.0
        %1788 = vmatprep.subr.mxu0 0.0
        %1789 = vmatpush1.msra.mxu0 0.0
        %1790 = vmatprep.subr.mxu0 0.0
        %1791 = vmatpush1.msra.mxu0 0.0
        %1792 = vmatprep.subr.mxu0 0.0
        %1793 = vmatpush1.msra.mxu0 0.0
        %1794 = vmatprep.subr.mxu0 0.0
        %1795 = vmatpush1.msra.mxu0 0.0
        %1796 = vmatprep.subr.mxu0 0.0
        %1797 = vmatpush1.msra.mxu0 0.0
        %1798 = vmatprep.subr.mxu0 0.0
        %1799 = vmatpush1.msra.mxu0 0.0
        %1800 = vmatprep.subr.mxu0 0.0
        %1801 = vmatpush1.msra.mxu0 0.0
        %1802 = vmatprep.subr.mxu0 0.0
        %1803 = vmatpush1.msra.mxu0 0.0
        %1804 = vmatprep.subr.mxu0 0.0
        %1805 = vmatpush1.msra.mxu0 0.0
        %1806 = vmatprep.subr.mxu0 0.0
        %1807 = vmatpush1.msra.mxu0 0.0
        %1808 = vmatprep.mubr.f32.mxu0 0.0
        %1809 = vmatmul.mubr.f32.gmra.mrb[0].mxu0 %v1705
        %v1810 = vpop.f32.mrb[0].mxu0
        %v1811 = vadd.f32 %v1742, %v1810
        %v1812 = vpop.f32.mrb[0].mxu0
        %1813 = vmatprep.mubr.f32.mxu0 0.0
        %1814 = vmatmul.mubr.f32.gmra.mrb[0].mxu0 %v1706
        %v1815 = vpop.f32.mrb[0].mxu0
        %v1816 = vadd.f32 %v1742, %v1815
        %v1817 = vpop.f32.mrb[0].mxu0
        %1818 = vmatprep.mubr.f32.mxu0 0.0
        %1819 = vmatmul.mubr.f32.gmra.mrb[0].mxu0 %v1707
        %v1820 = vpop.f32.mrb[0].mxu0
        %v1821 = vadd.f32 %v1742, %v1820
        %v1822 = vpop.f32.mrb[0].mxu0
        %1823 = vmatprep.mubr.f32.mxu0 0.0
        %1824 = vmatmul.mubr.f32.gmra.mrb[0].mxu0 %v1708
        %v1825 = vpop.f32.mrb[0].mxu0
        %v1826 = vadd.f32 %v1742, %v1825
        %v1827 = vpop.f32.mrb[0].mxu0
        %1828 = vmatprep.mubr.f32.mxu0 0.0
        %1829 = vmatmul.mubr.f32.gmra.mrb[0].mxu0 %v1709
        %v1830 = vpop.f32.mrb[0].mxu0
        %v1831 = vadd.f32 %v1742, %v1830
        %v1832 = vpop.f32.mrb[0].mxu0
        %1833 = vmatprep.mubr.f32.mxu0 0.0
        %1834 = vmatmul.mubr.f32.gmra.mrb[0].mxu0 %v1710
        %v1835 = vpop.f32.mrb[0].mxu0
        %v1836 = vadd.f32 %v1742, %v1835
        %v1837 = vpop.f32.mrb[0].mxu0
        %1838 = vmatprep.mubr.f32.mxu0 0.0
        %1839 = vmatmul.mubr.f32.gmra.mrb[0].mxu0 %v1711
        %v1840 = vpop.f32.mrb[0].mxu0
        %v1841 = vadd.f32 %v1742, %v1840
        %v1842 = vpop.f32.mrb[0].mxu0
        %1843 = vmatprep.mubr.f32.mxu0 0.0
        %1844 = vmatmul.mubr.f32.gmra.mrb[0].mxu0 %v1712
        %v1845 = vpop.f32.mrb[0].mxu0
        %v1846 = vadd.f32 %v1742, %v1845
        %v1847 = vpop.f32.mrb[0].mxu0
        %1848 = vmatprep.mubr.f32.mxu0 0.0
        %1849 = vmatmul.mubr.f32.gmra.mrb[0].mxu0 %v1713
        %v1850 = vpop.f32.mrb[0].mxu0
        %v1851 = vadd.f32 %v1742, %v1850
        %v1852 = vpop.f32.mrb[0].mxu0
        %1853 = vmatprep.mubr.f32.mxu0 0.0
        %1854 = vmatmul.mubr.f32.gmra.mrb[0].mxu0 %v1714
        %v1855 = vpop.f32.mrb[0].mxu0
        %v1856 = vadd.f32 %v1742, %v1855
        %v1857 = vpop.f32.mrb[0].mxu0
        %1858 = vmatprep.mubr.f32.mxu0 0.0
        %1859 = vmatmul.mubr.f32.gmra.mrb[0].mxu0 %v1715
        %v1860 = vpop.f32.mrb[0].mxu0
        %v1861 = vadd.f32 %v1742, %v1860
        %v1862 = vpop.f32.mrb[0].mxu0
        %1863 = vmatprep.mubr.f32.mxu0 0.0
        %1864 = vmatmul.mubr.f32.gmra.mrb[0].mxu0 %v1716
        %v1865 = vpop.f32.mrb[0].mxu0
        %v1866 = vadd.f32 %v1742, %v1865
        %v1867 = vpop.f32.mrb[0].mxu0
        %1868 = vmatprep.mubr.f32.mxu0 0.0
        %1869 = vmatmul.mubr.f32.gmra.mrb[0].mxu0 %v1717
        %v1870 = vpop.f32.mrb[0].mxu0
        %v1871 = vadd.f32 %v1742, %v1870
        %v1872 = vpop.f32.mrb[0].mxu0
        %1873 = vmatprep.mubr.f32.mxu0 0.0
        %1874 = vmatmul.mubr.f32.gmra.mrb[0].mxu0 %v1718
        %v1875 = vpop.f32.mrb[0].mxu0
        %v1876 = vadd.f32 %v1742, %v1875
        %v1877 = vpop.f32.mrb[0].mxu0
        %1878 = vmatprep.mubr.f32.mxu0 0.0
        %1879 = vmatmul.mubr.f32.gmra.mrb[0].mxu0 %v1719
        %v1880 = vpop.f32.mrb[0].mxu0
        %v1881 = vadd.f32 %v1742, %v1880
        %v1882 = vpop.f32.mrb[0].mxu0
        %1883 = vmatprep.mubr.f32.mxu0 0.0
        %1884 = vmatmul.mubr.f32.gmra.mrb[0].mxu0 %v1720
        %v1885 = vpop.f32.mrb[0].mxu0
        %v1886 = vadd.f32 %v1742, %v1885
        %v1887 = vpop.f32.mrb[0].mxu0
        %1888 = vdwg.mxu0
        %1889 = vst [vmem:[%s433] sm:$0xff] %v1811
        %1890 = vst [vmem:[%s433 + $0x8] sm:$0xff] %v1816
        %1891 = vst [vmem:[%s433 + $0x10] sm:$0xff] %v1821
        %1892 = vst [vmem:[%s433 + $0x18] sm:$0xff] %v1826
        %1893 = vst [vmem:[%s433 + $0x20] sm:$0xff] %v1831
        %1894 = vst [vmem:[%s433 + $0x28] sm:$0xff] %v1836
        %1895 = vst [vmem:[%s433 + $0x30] sm:$0xff] %v1841
        %1896 = vst [vmem:[%s433 + $0x38] sm:$0xff] %v1846
        %1897 = vst [vmem:[%s433 + $0x40] sm:$0xff] %v1851
        %1898 = vst [vmem:[%s433 + $0x48] sm:$0xff] %v1856
        %1899 = vst [vmem:[%s433 + $0x50] sm:$0xff] %v1861
        %1900 = vst [vmem:[%s433 + $0x58] sm:$0xff] %v1866
        %1901 = vst [vmem:[%s433 + $0x60] sm:$0xff] %v1871
        %1902 = vst [vmem:[%s433 + $0x68] sm:$0xff] %v1876
        %1903 = vst [vmem:[%s433 + $0x70] sm:$0xff] %v1881
        %1904 = vst [vmem:[%s433 + $0x78] sm:$0xff] %v1886
        %s1905 = sand.u32 %s204, 1
        %s1906 = sand.u32 %s204, 1
        %s1907 = smul.addr %s1906, 128
        %s1908 = scalar_lea.vmem [#allocation4], %s1907
        %s1909 = sand.u32 %s230, 1
        %s1910 = scalar_lea.sflag [#allocation6], %s1909
        %s1911 = sand.u32 %s230, 1
        %s1912 = smul.addr %s1911, 16
        %s1913 = scalar_lea.vmem [#allocation5], %s1912
        // Predicated region
        $region91: #{gru_sequence.1} parent=81 // pred_check
          %p1914 = pneg %p214
        $region92: #{gru_sequence.1} parent=81 // pred_check_branch
          %1916 = sbr.rel (%p1914) target = $region94
        $region93: #{gru_sequence.1} parent=81 // pred_region
          %s1917 = smul.u32 8, %s28
          %s1918 = smul.u32 2, %s27
          %s1919 = smul.addr %s1917, 4
          %s1920 = sadd.s32 %s1918, %s1919
          %s1921 = smul.addr %s1920, 8
          %s1922 = scalar_lea.vmem %s7, %s1921
          // Predicated region
          $region95: #{gru_sequence.1} parent=93 // pred_check
            _
          $region96: #{gru_sequence.1} parent=93 // pred_check_branch
            %1924 = sbr.rel (0) target = $region98
          $region97: #{gru_sequence.1} parent=93 // pred_region
            // Predicated region
            $region99: #{gru_sequence.1} parent=97 // pred_check
              _
            $region100: #{gru_sequence.1} parent=97 // pred_check_branch
              %1926 = sbr.rel (0) target = $region102
            $region101: #{gru_sequence.1} parent=97 // pred_region
              // Predicated region
              $region114: #{gru_sequence.1} parent=101 // pred_check
                _
              $region115: #{gru_sequence.1} parent=101 // pred_check_branch
                %1971 = sbr.rel (0) target = $region117
              $region116: #{gru_sequence.1} parent=101 // pred_region
                loop: start=0, step=1, limit=1
                $region118: #{gru_sequence.1} parent=116 // loop_pre_header
                  _
                $region119: #{gru_sequence.1} parent=116 // loop_header
                  %s1973 = sphi 0, %s1977
                  %p1974 = scmp.ge.s32.totalorder %s1973, 1
                  %s1978 = sphi %s1908, %s1908
                  %s1979 = sphi %s1922, %s1922
                $region120: #{gru_sequence.1} parent=116 // loop_header_branch
                  %1976 = sbr.rel (%p1974) target = $region124
                $region121: #{gru_sequence.1} parent=116 // loop_body
                  %v1980 = vld [vmem:[%s1978] sm:$0xff]
                  %1981 = vst [vmem:[%s1979] sm:$0xff] %v1980
                  %v1982 = vld [vmem:[%s1978 + $0x8] sm:$0xff]
                  %1983 = vst [vmem:[%s1979 + $0x8] sm:$0xff] %v1982
                  %v1984 = vld [vmem:[%s1978 + $0x10] sm:$0xff]
                  %1985 = vst [vmem:[%s1979 + $0x20] sm:$0xff] %v1984
                  %v1986 = vld [vmem:[%s1978 + $0x18] sm:$0xff]
                  %1987 = vst [vmem:[%s1979 + $0x28] sm:$0xff] %v1986
                  %v1988 = vld [vmem:[%s1978 + $0x20] sm:$0xff]
                  %1989 = vst [vmem:[%s1979 + $0x40] sm:$0xff] %v1988
                  %v1990 = vld [vmem:[%s1978 + $0x28] sm:$0xff]
                  %1991 = vst [vmem:[%s1979 + $0x48] sm:$0xff] %v1990
                  %v1992 = vld [vmem:[%s1978 + $0x30] sm:$0xff]
                  %1993 = vst [vmem:[%s1979 + $0x60] sm:$0xff] %v1992
                  %v1994 = vld [vmem:[%s1978 + $0x38] sm:$0xff]
                  %1995 = vst [vmem:[%s1979 + $0x68] sm:$0xff] %v1994
                  %v1996 = vld [vmem:[%s1978 + $0x40] sm:$0xff]
                  %1997 = vst [vmem:[%s1979 + $0x80] sm:$0xff] %v1996
                  %v1998 = vld [vmem:[%s1978 + $0x48] sm:$0xff]
                  %1999 = vst [vmem:[%s1979 + $0x88] sm:$0xff] %v1998
                  %v2000 = vld [vmem:[%s1978 + $0x50] sm:$0xff]
                  %2001 = vst [vmem:[%s1979 + $0xa0] sm:$0xff] %v2000
                  %v2002 = vld [vmem:[%s1978 + $0x58] sm:$0xff]
                  %2003 = vst [vmem:[%s1979 + $0xa8] sm:$0xff] %v2002
                  %v2004 = vld [vmem:[%s1978 + $0x60] sm:$0xff]
                  %2005 = vst [vmem:[%s1979 + $0xc0] sm:$0xff] %v2004
                  %v2006 = vld [vmem:[%s1978 + $0x68] sm:$0xff]
                  %2007 = vst [vmem:[%s1979 + $0xc8] sm:$0xff] %v2006
                  %v2008 = vld [vmem:[%s1978 + $0x70] sm:$0xff]
                  %2009 = vst [vmem:[%s1979 + $0xe0] sm:$0xff] %v2008
                  %v2010 = vld [vmem:[%s1978 + $0x78] sm:$0xff]
                  %2011 = vst [vmem:[%s1979 + $0xe8] sm:$0xff] %v2010
                $region122: #{gru_sequence.1} parent=116 // loop_footer
                  %s1977 = sadd.s32 1, %s1973
                $region123: #{gru_sequence.1} parent=116 // loop_footer_branch
                  %1972 = sbr.rel target = $region119
                $region124: #{gru_sequence.1} parent=116 // loop_exit
                  _
              $region117: #{gru_sequence.1} parent=101 // pred_fallthru
                _
              // Predicated region
              $region125: #{gru_sequence.1} parent=101 // pred_check
                _
              $region126: #{gru_sequence.1} parent=101 // pred_check_branch
                %2013 = sbr.rel target = $region128
              $region127: #{gru_sequence.1} parent=101 // pred_region
                _
              $region128: #{gru_sequence.1} parent=101 // pred_fallthru
                _
            $region102: #{gru_sequence.1} parent=97 // pred_fallthru
              _
            // Predicated region
            $region103: #{gru_sequence.1} parent=97 // pred_check
              _
            $region104: #{gru_sequence.1} parent=97 // pred_check_branch
              %1928 = sbr.rel target = $region106
            $region105: #{gru_sequence.1} parent=97 // pred_region
              loop: start=0, step=1, limit=1
              $region107: #{gru_sequence.1} parent=105 // loop_pre_header
                _
              $region108: #{gru_sequence.1} parent=105 // loop_header
                %s1931 = sphi 0, %s1935
                %p1932 = scmp.ge.s32.totalorder %s1931, 1
                %s1936 = sphi %s1908, %s1908
                %s1937 = sphi %s1922, %s1922
              $region109: #{gru_sequence.1} parent=105 // loop_header_branch
                %1934 = sbr.rel (%p1932) target = $region113
              $region110: #{gru_sequence.1} parent=105 // loop_body
                %v1938 = vld [vmem:[%s1936] sm:$0xff]
                %1939 = vst [vmem:[%s1937] sm:$0xff] %v1938
                %v1940 = vld [vmem:[%s1936 + $0x8] sm:$0xff]
                %1941 = vst [vmem:[%s1937 + $0x8] sm:$0xff] %v1940
                %v1942 = vld [vmem:[%s1936 + $0x10] sm:$0xff]
                %1943 = vst [vmem:[%s1937 + $0x20] sm:$0xff] %v1942
                %v1944 = vld [vmem:[%s1936 + $0x18] sm:$0xff]
                %1945 = vst [vmem:[%s1937 + $0x28] sm:$0xff] %v1944
                %v1946 = vld [vmem:[%s1936 + $0x20] sm:$0xff]
                %1947 = vst [vmem:[%s1937 + $0x40] sm:$0xff] %v1946
                %v1948 = vld [vmem:[%s1936 + $0x28] sm:$0xff]
                %1949 = vst [vmem:[%s1937 + $0x48] sm:$0xff] %v1948
                %v1950 = vld [vmem:[%s1936 + $0x30] sm:$0xff]
                %1951 = vst [vmem:[%s1937 + $0x60] sm:$0xff] %v1950
                %v1952 = vld [vmem:[%s1936 + $0x38] sm:$0xff]
                %1953 = vst [vmem:[%s1937 + $0x68] sm:$0xff] %v1952
                %v1954 = vld [vmem:[%s1936 + $0x40] sm:$0xff]
                %1955 = vst [vmem:[%s1937 + $0x80] sm:$0xff] %v1954
                %v1956 = vld [vmem:[%s1936 + $0x48] sm:$0xff]
                %1957 = vst [vmem:[%s1937 + $0x88] sm:$0xff] %v1956
                %v1958 = vld [vmem:[%s1936 + $0x50] sm:$0xff]
                %1959 = vst [vmem:[%s1937 + $0xa0] sm:$0xff] %v1958
                %v1960 = vld [vmem:[%s1936 + $0x58] sm:$0xff]
                %1961 = vst [vmem:[%s1937 + $0xa8] sm:$0xff] %v1960
                %v1962 = vld [vmem:[%s1936 + $0x60] sm:$0xff]
                %1963 = vst [vmem:[%s1937 + $0xc0] sm:$0xff] %v1962
                %v1964 = vld [vmem:[%s1936 + $0x68] sm:$0xff]
                %1965 = vst [vmem:[%s1937 + $0xc8] sm:$0xff] %v1964
                %v1966 = vld [vmem:[%s1936 + $0x70] sm:$0xff]
                %1967 = vst [vmem:[%s1937 + $0xe0] sm:$0xff] %v1966
                %v1968 = vld [vmem:[%s1936 + $0x78] sm:$0xff]
                %1969 = vst [vmem:[%s1937 + $0xe8] sm:$0xff] %v1968
              $region111: #{gru_sequence.1} parent=105 // loop_footer
                %s1935 = sadd.s32 1, %s1931
              $region112: #{gru_sequence.1} parent=105 // loop_footer_branch
                %1930 = sbr.rel target = $region108
              $region113: #{gru_sequence.1} parent=105 // loop_exit
                _
            $region106: #{gru_sequence.1} parent=97 // pred_fallthru
              _
          $region98: #{gru_sequence.1} parent=93 // pred_fallthru
            _
          %2014 = vnop
        $region94: #{gru_sequence.1} parent=81 // pred_fallthru
          _
        // Predicated region
        $region129: #{gru_sequence.1} parent=81 // pred_check
          %p2015 = pneg %p240
        $region130: #{gru_sequence.1} parent=81 // pred_check_branch
          %2017 = sbr.rel (%p2015) target = $region132
        $region131: #{gru_sequence.1} parent=81 // pred_region
          %s2018 = smul.u32 2, %s27
          %s2020 = ssub.s32 256, 256
          %2021 = vsyncadd %s1910, %s2020
          %s2022 = smul.addr %s2018, 128
          %s2023 = scalar_lea.hbm %s8, %s2022
          %s2024 = sshll.u32 %s1913, 4
          %s2025 = int_to_ptr.vmem [resolvable:$true] %s2024
          %2030 = dma.vmem_to_hbm [thread:$0]  %s2025, 256, %s2023, %s1910, 128, 128, 8
        $region132: #{gru_sequence.1} parent=81 // pred_fallthru
          _
      $region82: #{gru_sequence.1} parent=5 // pred_fallthru
        _
      %p2031 = scmp.le.s32.totalorder 2, %s18
      // Predicated region
      $region133: #{gru_sequence.1} parent=5 // pred_check
        %p2032 = pneg %p2031
      $region134: #{gru_sequence.1} parent=5 // pred_check_branch
        %2034 = sbr.rel (%p2032) target = $region136
      $region135: #{gru_sequence.1} parent=5 // pred_region
        %s2035 = ssub.s32 %s18, 2
        // Predicated region
        $region137: #{gru_sequence.1} parent=135 // pred_check
          %p2036 = pneg %p220
        $region138: #{gru_sequence.1} parent=135 // pred_check_branch
          %2038 = sbr.rel (%p2036) target = $region140
        $region139: #{gru_sequence.1} parent=135 // pred_region
          %s2039 = sand.u32 %s205, 1
          %s2040 = sand.u32 %s205, 1
          %s2041 = smul.addr %s2040, 128
          %s2042 = scalar_lea.vmem [#allocation4], %s2041
        $region140: #{gru_sequence.1} parent=135 // pred_fallthru
          _
        // Predicated region
        $region141: #{gru_sequence.1} parent=135 // pred_check
          %p2043 = pneg %p246
        $region142: #{gru_sequence.1} parent=135 // pred_check_branch
          %2045 = sbr.rel (%p2043) target = $region144
        $region143: #{gru_sequence.1} parent=135 // pred_region
          %s2046 = sand.u32 %s231, 1
          %s2047 = scalar_lea.sflag [#allocation6], %s2046
          %s2048 = sand.u32 %s231, 1
          %s2049 = smul.addr %s2048, 16
          %s2050 = scalar_lea.vmem [#allocation5], %s2049
          %2051 = dma.done %s2047, 256
        $region144: #{gru_sequence.1} parent=135 // pred_fallthru
          _
      $region136: #{gru_sequence.1} parent=5 // pred_fallthru
        _
    $region6: #{gru_sequence.1} parent=1 // loop_footer
      %s22 = sadd.s32 1, %s18
    $region7: #{gru_sequence.1} parent=1 // loop_footer_branch
      %17 = sbr.rel target = $region3
    $region8: #{gru_sequence.1} parent=1 // loop_exit
      _
    %2052 = vsyncpa [#allocation6], 1
    %s2053 = scalar_lea.sflag [#allocation6], 1
    %2054 = vsyncpa %s2053, 1

</llo_original>
